<compile_context>
chip_gen: v6e
topology: v6e:2x2x1
jax: 0.10.0
libtpu: 0.0.40
codegen_flags: <defaults>
</compile_context>

<pallas_src>
import math

import jax
import jax.numpy as jnp
from jax.experimental import pallas as pl
from jax.experimental.pallas import tpu as pltpu

BN_EPS = 1e-5
BN_SCALE = 1.0 / math.sqrt(1.0 + BN_EPS)


# ------------------------------ kernels ---------------------------------------


def _make_encoder_kernel(z_dim, h_dim, n_nodes, pad, fuse_tails):
    """Encoder + prior + decoder hiddens (+ optionally the wide decoder tails)."""

    def kernel(*refs):
        (feat_ref, colsum_ref, u_ref, ycf_ref,
         wg_ref, bg_ref, wp_ref, bp_ref,
         we_g_ref, we_u_ref, we_y_ref, be_ref,
         w1_z_ref, w1_y_ref, b1_ref, w2_ref, b2_ref) = refs[:17]
        if fuse_tails:
            (w3x_ref, b3x_ref, w3a_ref, b3a_ref, out_ref) = refs[17:]
        else:
            (out_ref,) = refs[17:]

        feat = feat_ref[...]            # [bt, N, D]
        colsum = colsum_ref[...]        # [bt, N]   (adj column sums, reduced in wrapper)
        u = u_ref[...]                  # [bt, 1]
        ycf = ycf_ref[...]              # [bt, 1]

        # ---- collapsed GCN (A X W + b) + 'mean' (=sum) pooling:
        #   sum_i (A X W + b)_i = ((sum_i A[:, i, :]) . X summed over nodes) @ W + N*b
        s = jnp.sum(colsum[:, :, None] * feat, axis=1)                      # [bt, D]
        graph_rep = (jnp.dot(s, wg_ref[...], preferred_element_type=jnp.float32)
                     + float(n_nodes) * bg_ref[...])                        # [bt, H]

        # ---- prior params (mean | var packed along lanes)
        prior = u * wp_ref[...] + bp_ref[...]                               # [bt, 2Z]
        z_u_mu = prior[:, :z_dim]
        z_u_logvar = jax.nn.sigmoid(prior[:, z_dim:])

        # ---- encoder heads on cat([graph_rep, u, y_cf]); Linear->BN(folded)->ReLU(->Sig)
        enc = jnp.maximum(
            jnp.dot(graph_rep, we_g_ref[...], preferred_element_type=jnp.float32)
            + u * we_u_ref[...] + ycf * we_y_ref[...] + be_ref[...], 0.0)   # [bt, 2Z]
        z_mu = enc[:, :z_dim]
        z_logvar = jax.nn.sigmoid(enc[:, z_dim:])

        # ---- reparameterize (eval mode): z = mu
        zs = z_mu

        # ---- decoder layer 1 (x | a fused: shared LHS), BN folded, ReLU
        h1 = jnp.maximum(
            jnp.dot(zs, w1_z_ref[...], preferred_element_type=jnp.float32)
            + ycf * w1_y_ref[...] + b1_ref[...], 0.0)                       # [bt, 2H]

        # ---- decoder layer 2 as block-diag(w2x, w2a): one MXU pass, BN folded, ReLU
        h2 = jnp.maximum(
            jnp.dot(h1, w2_ref[...], preferred_element_type=jnp.float32)
            + b2_ref[...], 0.0)                                             # [bt, 2H]

        pieces = [z_mu, z_logvar, z_u_mu, z_u_logvar]
        if fuse_tails:
            h2x = h2[:, :h_dim]
            h2a = h2[:, h_dim:]
            x_flat = (jnp.dot(h2x, w3x_ref[...], preferred_element_type=jnp.float32)
                      + b3x_ref[...])
            a_flat = jax.nn.sigmoid(
                jnp.dot(h2a, w3a_ref[...], preferred_element_type=jnp.float32)
                + b3a_ref[...])
            pieces += [x_flat, a_flat]
        else:
            pieces += [h2]
        if pad:
            pieces.append(jnp.zeros((u.shape[0], pad), jnp.float32))
        # single lane-dense (multiple-of-128) output slab -> unmasked full-vreg stores
        out_ref[...] = jnp.concatenate(pieces, axis=1)

    return kernel


def _make_tail_kernel(apply_sigmoid):
    def kernel(h_ref, w_ref, b_ref, o_ref):
        y = (jnp.dot(h_ref[...], w_ref[...], preferred_element_type=jnp.float32)
             + b_ref[...])
        if apply_sigmoid:
            y = jax.nn.sigmoid(y)
        o_ref[...] = y
    return kernel


# ------------------------------ tiling / limits --------------------------------


def _round_up(x, m):
    return ((x + m - 1) // m) * m


def _vmem_budget():
    """Generation-aware VMEM budget with headroom for Mosaic internal scratch."""
    cap = 64 << 20
    try:
        info = pltpu.get_tpu_info()
        cap = int(getattr(info, "vmem_capacity_bytes", cap))
    except Exception:
        pass
    # ~56 MiB on v7x (64 MiB physical), ~112 MiB on v5e/v6e (128 MiB physical)
    return int(min(cap - (8 << 20), cap * 7 // 8))


def _divisor_tile(total, cap, step):
    """Largest t <= cap, multiple of step, dividing total; fall back to total."""
    if total <= cap:
        return total
    t = (cap // step) * step
    while t >= step:
        if total % t == 0:
            return t
        t -= step
    return total


def _pick_batch_tile(B, per_row_f32, fixed_f32, budget, pref=512):
    """Batch tile from the VMEM budget (double-buffered data rows + 2x weights)."""
    if B <= 8:
        return B
    avail = budget // 4 - 2 * fixed_f32             # f32 elements left for data blocks
    bt_vmem = max(avail // (2 * max(per_row_f32, 1)), 8)
    cap = min(pref, int(bt_vmem))
    if B >= 16:
        # guarantee >= 2 grid steps so the parallel axis shards across v7x's 2 TCs
        cap = min(cap, max((B // 2 // 8) * 8, 8))
    cap = max(int(cap), 8)
    return _divisor_tile(B, cap, 8)


def _pick_col_tile(C, H, bt, budget, pref=2048):
    """Column tile for the wide tails: largest 128-multiple fitting the budget."""
    avail = budget // 8 - bt * H                    # per-buffer f32 element budget
    ct_vmem = avail // max(H + 1 + bt, 1)
    cap = max(128, min(pref, (int(ct_vmem) // 128) * 128))
    if C <= cap:
        return C
    return _divisor_tile(C, cap, 128)


# ------------------------------ pallas_call wrappers ----------------------------


def _encoder_call(params, features, colsum, u, y_cf, *, z_dim, h_dim, w_names,
                  n_nodes, slab_width, pad, fuse_tails, bt, budget, per_row, fixed):
    B, N, D = features.shape
    weights = tuple(params[n] for n in w_names)
    kernel = _make_encoder_kernel(z_dim, h_dim, n_nodes, pad, fuse_tails)

    in_specs = [
        pl.BlockSpec((bt, N, D), lambda i: (i, 0, 0)),   # features
        pl.BlockSpec((bt, N), lambda i: (i, 0)),         # adj column sums
        pl.BlockSpec((bt, 1), lambda i: (i, 0)),         # u
        pl.BlockSpec((bt, 1), lambda i: (i, 0)),         # y_cf
    ] + [pl.BlockSpec(w.shape, lambda i: (0, 0)) for w in weights]

    footprint = 4 * (2 * bt * per_row + 2 * fixed)       # bytes, double-buffered
    vmem_limit = int(min(budget, max(footprint + (8 << 20), 32 << 20)))

    return pl.pallas_call(
        kernel,
        out_shape=jax.ShapeDtypeStruct((B, slab_width), jnp.float32),
        grid_spec=pltpu.PrefetchScalarGridSpec(
            num_scalar_prefetch=0,
            grid=(B // bt,),
            in_specs=in_specs,
            out_specs=pl.BlockSpec((bt, slab_width), lambda i: (i, 0)),
        ),
        compiler_params=pltpu.CompilerParams(
            dimension_semantics=("parallel",),
            vmem_limit_bytes=vmem_limit,
        ),
    )(features, colsum, u, y_cf, *weights)


def _linear_tail(h, w, b, *, apply_sigmoid, bt, budget):
    """out[:, jtile] = act(h @ w[:, jtile] + b[:, jtile]).

    Grid is (columns, batch) with batch INNERMOST: the W3 column tile's block index is
    invariant over the inner axis, so it is DMA'd once and stays VMEM-resident while the
    batch tiles stream past it.
    """
    B, H = h.shape
    C = w.shape[1]
    ct = _pick_col_tile(C, H, bt, budget)
    footprint = 4 * 2 * (bt * H + H * ct + ct + bt * ct)
    vmem_limit = int(min(budget, max(footprint + (8 << 20), 32 << 20)))

    return pl.pallas_call(
        _make_tail_kernel(apply_sigmoid),
        out_shape=jax.ShapeDtypeStruct((B, C), jnp.float32),
        grid_spec=pltpu.PrefetchScalarGridSpec(
            num_scalar_prefetch=0,
            grid=(C // ct, B // bt),                       # batch innermost
            in_specs=[
                pl.BlockSpec((bt, H), lambda j, i: (i, 0)),
                pl.BlockSpec((H, ct), lambda j, i: (0, j)),
                pl.BlockSpec((1, ct), lambda j, i: (0, j)),
            ],
            out_specs=pl.BlockSpec((bt, ct), lambda j, i: (i, j)),
        ),
        compiler_params=pltpu.CompilerParams(
            dimension_semantics=("parallel", "parallel"),
            vmem_limit_bytes=vmem_limit,
        ),
    )(h, w, b)


# ------------------------------ parameter construction --------------------------


def _linear_params(key, fan_in, fan_out):
    """PyTorch nn.Linear default init: U(-1/sqrt(fan_in), 1/sqrt(fan_in))."""
    k = float(fan_in) ** -0.5
    kw, kb = jax.random.split(key)
    w = jax.random.uniform(kw, (fan_in, fan_out), jnp.float32, -k, k)
    b = jax.random.uniform(kb, (1, fan_out), jnp.float32, -k, k)
    return w, b


def init_graphcfe_params(key, x_dim, h_dim, z_dim, max_num_nodes):
    D, H, Z = x_dim, h_dim, z_dim
    keys = jax.random.split(key, 11)
    p = {}
    # GCNConv (dense A X W + b)
    p['wg'], p['bg'] = _linear_params(keys[0], D, H)
    # prior_mean / prior_var (1-layer MLPs on u), packed [mean | var] along lanes
    wpm, bpm = _linear_params(keys[1], 1, Z)
    wpv, bpv = _linear_params(keys[2], 1, Z)
    p['wp'] = jnp.concatenate([wpm, wpv], axis=1)                       # [1, 2Z]
    p['bp'] = jnp.concatenate([bpm, bpv], axis=1)
    # encoder mean / var heads (Linear -> BN(eval,fresh) -> ReLU (-> Sigmoid)); BN folded
    wem, bem = _linear_params(keys[3], H + 2, Z)
    wev, bev = _linear_params(keys[4], H + 2, Z)
    wem, bem = wem * BN_SCALE, bem * BN_SCALE
    wev, bev = wev * BN_SCALE, bev * BN_SCALE
    p['we_g'] = jnp.concatenate([wem[:H], wev[:H]], axis=1)             # [H, 2Z]
    p['we_u'] = jnp.concatenate([wem[H:H + 1], wev[H:H + 1]], axis=1)   # [1, 2Z]
    p['we_y'] = jnp.concatenate([wem[H + 1:], wev[H + 1:]], axis=1)     # [1, 2Z]
    p['be'] = jnp.concatenate([bem, bev], axis=1)                       # [1, 2Z]
    # decoder_x / decoder_a layer 1 (shared LHS cat([z, y_cf])), packed [x | a]; BN folded
    w1x, b1x = _linear_params(keys[5], Z + 1, H)
    w1a, b1a = _linear_params(keys[6], Z + 1, H)
    w1x, b1x = w1x * BN_SCALE, b1x * BN_SCALE
    w1a, b1a = w1a * BN_SCALE, b1a * BN_SCALE
    p['w1_z'] = jnp.concatenate([w1x[:Z], w1a[:Z]], axis=1)             # [Z, 2H]
    p['w1_y'] = jnp.concatenate([w1x[Z:], w1a[Z:]], axis=1)             # [1, 2H]
    p['b1'] = jnp.concatenate([b1x, b1a], axis=1)                       # [1, 2H]
    # decoder layer 2 as block-diagonal [2H, 2H] (one MXU pass for both branches); BN folded
    w2x, b2x = _linear_params(keys[7], H, H)
    w2a, b2a = _linear_params(keys[8], H, H)
    w2x, b2x = w2x * BN_SCALE, b2x * BN_SCALE
    w2a, b2a = w2a * BN_SCALE, b2a * BN_SCALE
    zblk = jnp.zeros((H, H), jnp.float32)
    p['w2'] = jnp.concatenate(
        [jnp.concatenate([w2x, zblk], axis=1),
         jnp.concatenate([zblk, w2a], axis=1)], axis=0)                 # [2H, 2H]
    p['b2'] = jnp.concatenate([b2x, b2a], axis=1)                       # [1, 2H]
    # decoder output layers (wide, no BN after them)
    p['w3x'], p['b3x'] = _linear_params(keys[9], H, max_num_nodes * x_dim)
    p['w3a'], p['b3a'] = _linear_params(keys[10], H, max_num_nodes * max_num_nodes)
    return p


# ------------------------------ forward -----------------------------------------


def graphcfe_forward(params, features, u, adj, y_cf, *,
                     x_dim, h_dim, z_dim, max_num_nodes):
    B, N, D = features.shape
    Z, H = z_dim, h_dim
    c_x = max_num_nodes * x_dim
    c_a = max_num_nodes * max_num_nodes

    budget = _vmem_budget()

    # Only the adjacency column-sums feed the collapsed GCN+sum-pool, so reduce adj in
    # the wrapper: the dominant [bt, N, N] block never has to live in VMEM.
    colsum = jnp.sum(adj, axis=1)                                        # [B, N]

    # Fuse the wide decoder GEMMs into the encoder kernel for small graphs (one launch,
    # no h2 HBM round-trip); for large graphs keep column-tiled tail kernels.
    tail_w_elems = H * (c_x + c_a) + c_x + c_a
    fuse_tails = (c_x + c_a) <= 4096 and 8 * tail_w_elems <= budget // 4

    w_names = ['wg', 'bg', 'wp', 'bp', 'we_g', 'we_u', 'we_y', 'be',
               'w1_z', 'w1_y', 'b1', 'w2', 'b2']
    if fuse_tails:
        w_names += ['w3x', 'b3x', 'w3a', 'b3a']

    width = 4 * Z + (c_x + c_a if fuse_tails else 2 * H)
    slab_width = _round_up(width, 128)                  # lane-dense, unmasked stores
    pad = slab_width - width
    per_row = N * D + N + 2 + slab_width                # f32 elems per batch row per buffer
    fixed = sum(math.prod(params[n].shape) for n in w_names)
    bt = _pick_batch_tile(B, per_row, fixed, budget)

    slab = _encoder_call(params, features, colsum, u, y_cf,
                         z_dim=Z, h_dim=H, w_names=w_names, n_nodes=max_num_nodes,
                         slab_width=slab_width, pad=pad, fuse_tails=fuse_tails,
                         bt=bt, budget=budget, per_row=per_row, fixed=fixed)

    z_mu = slab[:, 0 * Z:1 * Z]
    z_logvar = slab[:, 1 * Z:2 * Z]
    z_u_mu = slab[:, 2 * Z:3 * Z]
    z_u_logvar = slab[:, 3 * Z:4 * Z]

    if fuse_tails:
        off = 4 * Z
        feat_flat = slab[:, off:off + c_x]
        adj_flat = slab[:, off + c_x:off + c_x + c_a]
    else:
        h2x = slab[:, 4 * Z:4 * Z + H]
        h2a = slab[:, 4 * Z + H:4 * Z + 2 * H]
        feat_flat = _linear_tail(h2x, params['w3x'], params['b3x'],
                                 apply_sigmoid=False, bt=bt, budget=budget)
        adj_flat = _linear_tail(h2a, params['w3a'], params['b3a'],
                                apply_sigmoid=True, bt=bt, budget=budget)

    return {
        'z_mu': z_mu,
        'z_logvar': z_logvar,
        'adj_permuted': adj,
        'features_permuted': features,
        'adj_reconst': adj_flat.reshape(-1, max_num_nodes, max_num_nodes),
        'features_reconst': feat_flat.reshape(-1, max_num_nodes, x_dim),
        'z_u_mu': z_u_mu,
        'z_u_logvar': z_u_logvar,
    }


if __name__ == "__main__":
    # Small, module-consistent shapes.
    B = 2               # batch of graphs
    N = 8               # max_num_nodes
    X_DIM = 4           # node feature dim
    H_DIM = 32          # args.dim_h
    Z_DIM = 16          # args.dim_z

    key = jax.random.PRNGKey(0)
    k_feat, k_adj, k_u, k_y, k_param = jax.random.split(key, 5)

    features = jax.random.normal(k_feat, (B, N, X_DIM), jnp.float32)
    adj_rand = jax.random.uniform(k_adj, (B, N, N), jnp.float32)
    adj = (0.5 * (adj_rand + jnp.swapaxes(adj_rand, 1, 2)) > 0.5).astype(jnp.float32)
    u = jax.random.normal(k_u, (B, 1), jnp.float32)
    y_cf = jax.random.bernoulli(k_y, 0.5, (B, 1)).astype(jnp.float32)

    params = init_graphcfe_params(k_param, X_DIM, H_DIM, Z_DIM, N)

    out = graphcfe_forward(params, features, u, adj, y_cf,
                           x_dim=X_DIM, h_dim=H_DIM, z_dim=Z_DIM, max_num_nodes=N)
    jax.block_until_ready(out)

    # Light sanity checks on shapes.
    assert out['z_mu'].shape == (B, Z_DIM)
    assert out['z_logvar'].shape == (B, Z_DIM)
    assert out['z_u_mu'].shape == (B, Z_DIM)
    assert out['z_u_logvar'].shape == (B, Z_DIM)
    assert out['features_reconst'].shape == (B, N, X_DIM)
    assert out['adj_reconst'].shape == (B, N, N)

    print("KERNEL_OK")
</pallas_src>

<mosaic_0001>
module attributes {stable_mosaic.version = 11 : i64} {
  func.func @kernel(%arg0: i32, %arg1: memref<2x8x4xf32, #tpu.memory_space<vmem>>, %arg2: memref<2x8xf32, #tpu.memory_space<vmem>>, %arg3: memref<2x1xf32, #tpu.memory_space<vmem>>, %arg4: memref<2x1xf32, #tpu.memory_space<vmem>>, %arg5: memref<4x32xf32, #tpu.memory_space<vmem>>, %arg6: memref<1x32xf32, #tpu.memory_space<vmem>>, %arg7: memref<1x32xf32, #tpu.memory_space<vmem>>, %arg8: memref<1x32xf32, #tpu.memory_space<vmem>>, %arg9: memref<32x32xf32, #tpu.memory_space<vmem>>, %arg10: memref<1x32xf32, #tpu.memory_space<vmem>>, %arg11: memref<1x32xf32, #tpu.memory_space<vmem>>, %arg12: memref<1x32xf32, #tpu.memory_space<vmem>>, %arg13: memref<16x64xf32, #tpu.memory_space<vmem>>, %arg14: memref<1x64xf32, #tpu.memory_space<vmem>>, %arg15: memref<1x64xf32, #tpu.memory_space<vmem>>, %arg16: memref<64x64xf32, #tpu.memory_space<vmem>>, %arg17: memref<1x64xf32, #tpu.memory_space<vmem>>, %arg18: memref<32x32xf32, #tpu.memory_space<vmem>>, %arg19: memref<1x32xf32, #tpu.memory_space<vmem>>, %arg20: memref<32x64xf32, #tpu.memory_space<vmem>>, %arg21: memref<1x64xf32, #tpu.memory_space<vmem>>, %arg22: memref<2x256xf32, #tpu.memory_space<vmem>>) attributes {dimension_semantics = [#tpu.dimension_semantics<parallel>], iteration_bounds = array<i64: 1>, scalar_prefetch = 0 : i64, scratch_operands = 0 : i64, tpu.core_type = #tpu.core_type<tc>, window_params = [{transform_indices = @transform_0, window_bounds = array<i64: 2, 8, 4>}, {transform_indices = @transform_1, window_bounds = array<i64: 2, 8>}, {transform_indices = @transform_2, window_bounds = array<i64: 2, 1>}, {transform_indices = @transform_3, window_bounds = array<i64: 2, 1>}, {pipeline_mode = #tpu.pipeline_mode<synchronous>, transform_indices = @transform_4, window_bounds = array<i64: 4, 32>}, {pipeline_mode = #tpu.pipeline_mode<synchronous>, transform_indices = @transform_5, window_bounds = array<i64: 1, 32>}, {pipeline_mode = #tpu.pipeline_mode<synchronous>, transform_indices = @transform_6, window_bounds = array<i64: 1, 32>}, {pipeline_mode = #tpu.pipeline_mode<synchronous>, transform_indices = @transform_7, window_bounds = array<i64: 1, 32>}, {pipeline_mode = #tpu.pipeline_mode<synchronous>, transform_indices = @transform_8, window_bounds = array<i64: 32, 32>}, {pipeline_mode = #tpu.pipeline_mode<synchronous>, transform_indices = @transform_9, window_bounds = array<i64: 1, 32>}, {pipeline_mode = #tpu.pipeline_mode<synchronous>, transform_indices = @transform_10, window_bounds = array<i64: 1, 32>}, {pipeline_mode = #tpu.pipeline_mode<synchronous>, transform_indices = @transform_11, window_bounds = array<i64: 1, 32>}, {pipeline_mode = #tpu.pipeline_mode<synchronous>, transform_indices = @transform_12, window_bounds = array<i64: 16, 64>}, {pipeline_mode = #tpu.pipeline_mode<synchronous>, transform_indices = @transform_13, window_bounds = array<i64: 1, 64>}, {pipeline_mode = #tpu.pipeline_mode<synchronous>, transform_indices = @transform_14, window_bounds = array<i64: 1, 64>}, {pipeline_mode = #tpu.pipeline_mode<synchronous>, transform_indices = @transform_15, window_bounds = array<i64: 64, 64>}, {pipeline_mode = #tpu.pipeline_mode<synchronous>, transform_indices = @transform_16, window_bounds = array<i64: 1, 64>}, {pipeline_mode = #tpu.pipeline_mode<synchronous>, transform_indices = @transform_17, window_bounds = array<i64: 32, 32>}, {pipeline_mode = #tpu.pipeline_mode<synchronous>, transform_indices = @transform_18, window_bounds = array<i64: 1, 32>}, {pipeline_mode = #tpu.pipeline_mode<synchronous>, transform_indices = @transform_19, window_bounds = array<i64: 32, 64>}, {pipeline_mode = #tpu.pipeline_mode<synchronous>, transform_indices = @transform_20, window_bounds = array<i64: 1, 64>}, {transform_indices = @transform_21, window_bounds = array<i64: 2, 256>}]} {
    %c0 = arith.constant 0 : index
    %c0_0 = arith.constant 0 : index
    %c0_1 = arith.constant 0 : index
    %0 = vector.load %arg1[%c0, %c0_0, %c0_1] : memref<2x8x4xf32, #tpu.memory_space<vmem>>, vector<2x8x4xf32>
    %c0_2 = arith.constant 0 : index
    %c0_3 = arith.constant 0 : index
    %1 = vector.load %arg2[%c0_2, %c0_3] : memref<2x8xf32, #tpu.memory_space<vmem>>, vector<2x8xf32>
    %c0_4 = arith.constant 0 : index
    %c0_5 = arith.constant 0 : index
    %2 = vector.load %arg3[%c0_4, %c0_5] : memref<2x1xf32, #tpu.memory_space<vmem>>, vector<2x1xf32>
    %c0_6 = arith.constant 0 : index
    %c0_7 = arith.constant 0 : index
    %3 = vector.load %arg4[%c0_6, %c0_7] : memref<2x1xf32, #tpu.memory_space<vmem>>, vector<2x1xf32>
    %4 = vector.shape_cast %1 : vector<2x8xf32> to vector<2x8x1xf32>
    %5 = vector.broadcast %4 : vector<2x8x1xf32> to vector<2x8x4xf32>
    %6 = arith.mulf %5, %0 : vector<2x8x4xf32>
    %cst = arith.constant dense<0.000000e+00> : vector<2x4xf32>
    %7 = vector.multi_reduction <add>, %6, %cst [1] : vector<2x8x4xf32> to vector<2x4xf32>
    %c0_8 = arith.constant 0 : index
    %c0_9 = arith.constant 0 : index
    %8 = vector.load %arg5[%c0_8, %c0_9] : memref<4x32xf32, #tpu.memory_space<vmem>>, vector<4x32xf32>
    %cst_10 = arith.constant dense<0.000000e+00> : vector<2x32xf32>
    %9 = tpu.matmul %7, %8, %cst_10 {dimension_numbers = #tpu.dot_dimension_numbers<[1], [0], [0], [1], [0, 0, 1, 1], [], []>} : vector<2x4xf32>, vector<4x32xf32>, vector<2x32xf32> -> vector<2x32xf32>
    %c0_11 = arith.constant 0 : index
    %c0_12 = arith.constant 0 : index
    %10 = vector.load %arg6[%c0_11, %c0_12] : memref<1x32xf32, #tpu.memory_space<vmem>>, vector<1x32xf32>
    %cst_13 = arith.constant 8.000000e+00 : f32
    %11 = vector.broadcast %cst_13 : f32 to vector<1x32xf32>
    %12 = arith.mulf %11, %10 : vector<1x32xf32>
    %13 = vector.broadcast %12 : vector<1x32xf32> to vector<2x32xf32>
    %14 = arith.addf %9, %13 : vector<2x32xf32>
    %c0_14 = arith.constant 0 : index
    %c0_15 = arith.constant 0 : index
    %15 = vector.load %arg7[%c0_14, %c0_15] : memref<1x32xf32, #tpu.memory_space<vmem>>, vector<1x32xf32>
    %16 = vector.broadcast %2 : vector<2x1xf32> to vector<2x32xf32>
    %17 = vector.broadcast %15 : vector<1x32xf32> to vector<2x32xf32>
    %18 = arith.mulf %16, %17 : vector<2x32xf32>
    %c0_16 = arith.constant 0 : index
    %c0_17 = arith.constant 0 : index
    %19 = vector.load %arg8[%c0_16, %c0_17] : memref<1x32xf32, #tpu.memory_space<vmem>>, vector<1x32xf32>
    %20 = vector.broadcast %19 : vector<1x32xf32> to vector<2x32xf32>
    %21 = arith.addf %18, %20 : vector<2x32xf32>
    %22 = vector.extract_strided_slice %21 {offsets = [0, 0], sizes = [2, 16], strides = [1, 1]} : vector<2x32xf32> to vector<2x16xf32>
    %23 = vector.extract_strided_slice %21 {offsets = [0, 16], sizes = [2, 16], strides = [1, 1]} : vector<2x32xf32> to vector<2x16xf32>
    %24 = arith.negf %23 : vector<2x16xf32>
    %25 = math.exp %24 : vector<2x16xf32>
    %cst_18 = arith.constant 1.000000e+00 : f32
    %26 = vector.broadcast %cst_18 : f32 to vector<2x16xf32>
    %27 = arith.addf %26, %25 : vector<2x16xf32>
    %28 = arith.divf %26, %27 : vector<2x16xf32>
    %c0_19 = arith.constant 0 : index
    %c0_20 = arith.constant 0 : index
    %29 = vector.load %arg9[%c0_19, %c0_20] : memref<32x32xf32, #tpu.memory_space<vmem>>, vector<32x32xf32>
    %cst_21 = arith.constant dense<0.000000e+00> : vector<2x32xf32>
    %30 = tpu.matmul %14, %29, %cst_21 {dimension_numbers = #tpu.dot_dimension_numbers<[1], [0], [0], [1], [0, 0, 1, 1], [], []>} : vector<2x32xf32>, vector<32x32xf32>, vector<2x32xf32> -> vector<2x32xf32>
    %c0_22 = arith.constant 0 : index
    %c0_23 = arith.constant 0 : index
    %31 = vector.load %arg10[%c0_22, %c0_23] : memref<1x32xf32, #tpu.memory_space<vmem>>, vector<1x32xf32>
    %32 = vector.broadcast %2 : vector<2x1xf32> to vector<2x32xf32>
    %33 = vector.broadcast %31 : vector<1x32xf32> to vector<2x32xf32>
    %34 = arith.mulf %32, %33 : vector<2x32xf32>
    %35 = arith.addf %30, %34 : vector<2x32xf32>
    %c0_24 = arith.constant 0 : index
    %c0_25 = arith.constant 0 : index
    %36 = vector.load %arg11[%c0_24, %c0_25] : memref<1x32xf32, #tpu.memory_space<vmem>>, vector<1x32xf32>
    %37 = vector.broadcast %3 : vector<2x1xf32> to vector<2x32xf32>
    %38 = vector.broadcast %36 : vector<1x32xf32> to vector<2x32xf32>
    %39 = arith.mulf %37, %38 : vector<2x32xf32>
    %40 = arith.addf %35, %39 : vector<2x32xf32>
    %c0_26 = arith.constant 0 : index
    %c0_27 = arith.constant 0 : index
    %41 = vector.load %arg12[%c0_26, %c0_27] : memref<1x32xf32, #tpu.memory_space<vmem>>, vector<1x32xf32>
    %42 = vector.broadcast %41 : vector<1x32xf32> to vector<2x32xf32>
    %43 = arith.addf %40, %42 : vector<2x32xf32>
    %cst_28 = arith.constant 0.000000e+00 : f32
    %44 = vector.broadcast %cst_28 : f32 to vector<2x32xf32>
    %45 = arith.maximumf %43, %44 : vector<2x32xf32>
    %46 = vector.extract_strided_slice %45 {offsets = [0, 0], sizes = [2, 16], strides = [1, 1]} : vector<2x32xf32> to vector<2x16xf32>
    %47 = vector.extract_strided_slice %45 {offsets = [0, 16], sizes = [2, 16], strides = [1, 1]} : vector<2x32xf32> to vector<2x16xf32>
    %48 = arith.negf %47 : vector<2x16xf32>
    %49 = math.exp %48 : vector<2x16xf32>
    %cst_29 = arith.constant 1.000000e+00 : f32
    %50 = vector.broadcast %cst_29 : f32 to vector<2x16xf32>
    %51 = arith.addf %50, %49 : vector<2x16xf32>
    %52 = arith.divf %50, %51 : vector<2x16xf32>
    %c0_30 = arith.constant 0 : index
    %c0_31 = arith.constant 0 : index
    %53 = vector.load %arg13[%c0_30, %c0_31] : memref<16x64xf32, #tpu.memory_space<vmem>>, vector<16x64xf32>
    %cst_32 = arith.constant dense<0.000000e+00> : vector<2x64xf32>
    %54 = tpu.matmul %46, %53, %cst_32 {dimension_numbers = #tpu.dot_dimension_numbers<[1], [0], [0], [1], [0, 0, 1, 1], [], []>} : vector<2x16xf32>, vector<16x64xf32>, vector<2x64xf32> -> vector<2x64xf32>
    %c0_33 = arith.constant 0 : index
    %c0_34 = arith.constant 0 : index
    %55 = vector.load %arg14[%c0_33, %c0_34] : memref<1x64xf32, #tpu.memory_space<vmem>>, vector<1x64xf32>
    %56 = vector.broadcast %3 : vector<2x1xf32> to vector<2x64xf32>
    %57 = vector.broadcast %55 : vector<1x64xf32> to vector<2x64xf32>
    %58 = arith.mulf %56, %57 : vector<2x64xf32>
    %59 = arith.addf %54, %58 : vector<2x64xf32>
    %c0_35 = arith.constant 0 : index
    %c0_36 = arith.constant 0 : index
    %60 = vector.load %arg15[%c0_35, %c0_36] : memref<1x64xf32, #tpu.memory_space<vmem>>, vector<1x64xf32>
    %61 = vector.broadcast %60 : vector<1x64xf32> to vector<2x64xf32>
    %62 = arith.addf %59, %61 : vector<2x64xf32>
    %cst_37 = arith.constant 0.000000e+00 : f32
    %63 = vector.broadcast %cst_37 : f32 to vector<2x64xf32>
    %64 = arith.maximumf %62, %63 : vector<2x64xf32>
    %c0_38 = arith.constant 0 : index
    %c0_39 = arith.constant 0 : index
    %65 = vector.load %arg16[%c0_38, %c0_39] : memref<64x64xf32, #tpu.memory_space<vmem>>, vector<64x64xf32>
    %cst_40 = arith.constant dense<0.000000e+00> : vector<2x64xf32>
    %66 = tpu.matmul %64, %65, %cst_40 {dimension_numbers = #tpu.dot_dimension_numbers<[1], [0], [0], [1], [0, 0, 1, 1], [], []>} : vector<2x64xf32>, vector<64x64xf32>, vector<2x64xf32> -> vector<2x64xf32>
    %c0_41 = arith.constant 0 : index
    %c0_42 = arith.constant 0 : index
    %67 = vector.load %arg17[%c0_41, %c0_42] : memref<1x64xf32, #tpu.memory_space<vmem>>, vector<1x64xf32>
    %68 = vector.broadcast %67 : vector<1x64xf32> to vector<2x64xf32>
    %69 = arith.addf %66, %68 : vector<2x64xf32>
    %cst_43 = arith.constant 0.000000e+00 : f32
    %70 = vector.broadcast %cst_43 : f32 to vector<2x64xf32>
    %71 = arith.maximumf %69, %70 : vector<2x64xf32>
    %72 = vector.extract_strided_slice %71 {offsets = [0, 0], sizes = [2, 32], strides = [1, 1]} : vector<2x64xf32> to vector<2x32xf32>
    %73 = vector.extract_strided_slice %71 {offsets = [0, 32], sizes = [2, 32], strides = [1, 1]} : vector<2x64xf32> to vector<2x32xf32>
    %c0_44 = arith.constant 0 : index
    %c0_45 = arith.constant 0 : index
    %74 = vector.load %arg18[%c0_44, %c0_45] : memref<32x32xf32, #tpu.memory_space<vmem>>, vector<32x32xf32>
    %cst_46 = arith.constant dense<0.000000e+00> : vector<2x32xf32>
    %75 = tpu.matmul %72, %74, %cst_46 {dimension_numbers = #tpu.dot_dimension_numbers<[1], [0], [0], [1], [0, 0, 1, 1], [], []>} : vector<2x32xf32>, vector<32x32xf32>, vector<2x32xf32> -> vector<2x32xf32>
    %c0_47 = arith.constant 0 : index
    %c0_48 = arith.constant 0 : index
    %76 = vector.load %arg19[%c0_47, %c0_48] : memref<1x32xf32, #tpu.memory_space<vmem>>, vector<1x32xf32>
    %77 = vector.broadcast %76 : vector<1x32xf32> to vector<2x32xf32>
    %78 = arith.addf %75, %77 : vector<2x32xf32>
    %c0_49 = arith.constant 0 : index
    %c0_50 = arith.constant 0 : index
    %79 = vector.load %arg20[%c0_49, %c0_50] : memref<32x64xf32, #tpu.memory_space<vmem>>, vector<32x64xf32>
    %cst_51 = arith.constant dense<0.000000e+00> : vector<2x64xf32>
    %80 = tpu.matmul %73, %79, %cst_51 {dimension_numbers = #tpu.dot_dimension_numbers<[1], [0], [0], [1], [0, 0, 1, 1], [], []>} : vector<2x32xf32>, vector<32x64xf32>, vector<2x64xf32> -> vector<2x64xf32>
    %c0_52 = arith.constant 0 : index
    %c0_53 = arith.constant 0 : index
    %81 = vector.load %arg21[%c0_52, %c0_53] : memref<1x64xf32, #tpu.memory_space<vmem>>, vector<1x64xf32>
    %82 = vector.broadcast %81 : vector<1x64xf32> to vector<2x64xf32>
    %83 = arith.addf %80, %82 : vector<2x64xf32>
    %84 = arith.negf %83 : vector<2x64xf32>
    %85 = math.exp %84 : vector<2x64xf32>
    %cst_54 = arith.constant 1.000000e+00 : f32
    %86 = vector.broadcast %cst_54 : f32 to vector<2x64xf32>
    %87 = arith.addf %86, %85 : vector<2x64xf32>
    %88 = arith.divf %86, %87 : vector<2x64xf32>
    %cst_55 = arith.constant 0.000000e+00 : f32
    %89 = vector.broadcast %cst_55 : f32 to vector<2x96xf32>
    %90 = tpu.concatenate %46, %52, %22, %28, %78, %88, %89 in 1 : vector<2x16xf32>, vector<2x16xf32>, vector<2x16xf32>, vector<2x16xf32>, vector<2x32xf32>, vector<2x64xf32>, vector<2x96xf32> -> vector<2x256xf32>
    %c0_56 = arith.constant 0 : index
    %c0_57 = arith.constant 0 : index
    %91 = vector.load %arg22[%c0_56, %c0_57] : memref<2x256xf32, #tpu.memory_space<vmem>>, vector<2x256xf32>
    tpu.vector_store %arg22[%c0_56, %c0_57], %90 {strides = array<i32>} : memref<2x256xf32, #tpu.memory_space<vmem>>, vector<2x256xf32>,
    return
  }
  func.func @transform_0(%arg0: i32) -> (i32, i32, i32) {
    %c0_i32 = arith.constant 0 : i32
    %c0_i32_0 = arith.constant 0 : i32
    %c0_i32_1 = arith.constant 0 : i32
    return %arg0, %c0_i32, %c0_i32_0 : i32, i32, i32
  }
  func.func @transform_1(%arg0: i32) -> (i32, i32) {
    %c0_i32 = arith.constant 0 : i32
    %c0_i32_0 = arith.constant 0 : i32
    return %arg0, %c0_i32 : i32, i32
  }
  func.func @transform_2(%arg0: i32) -> (i32, i32) {
    %c0_i32 = arith.constant 0 : i32
    %c0_i32_0 = arith.constant 0 : i32
    return %arg0, %c0_i32 : i32, i32
  }
  func.func @transform_3(%arg0: i32) -> (i32, i32) {
    %c0_i32 = arith.constant 0 : i32
    %c0_i32_0 = arith.constant 0 : i32
    return %arg0, %c0_i32 : i32, i32
  }
  func.func @transform_4(%arg0: i32) -> (i32, i32) {
    %c0_i32 = arith.constant 0 : i32
    %c0_i32_0 = arith.constant 0 : i32
    %c0_i32_1 = arith.constant 0 : i32
    return %c0_i32, %c0_i32_0 : i32, i32
  }
  func.func @transform_5(%arg0: i32) -> (i32, i32) {
    %c0_i32 = arith.constant 0 : i32
    %c0_i32_0 = arith.constant 0 : i32
    %c0_i32_1 = arith.constant 0 : i32
    return %c0_i32, %c0_i32_0 : i32, i32
  }
  func.func @transform_6(%arg0: i32) -> (i32, i32) {
    %c0_i32 = arith.constant 0 : i32
    %c0_i32_0 = arith.constant 0 : i32
    %c0_i32_1 = arith.constant 0 : i32
    return %c0_i32, %c0_i32_0 : i32, i32
  }
  func.func @transform_7(%arg0: i32) -> (i32, i32) {
    %c0_i32 = arith.constant 0 : i32
    %c0_i32_0 = arith.constant 0 : i32
    %c0_i32_1 = arith.constant 0 : i32
    return %c0_i32, %c0_i32_0 : i32, i32
  }
  func.func @transform_8(%arg0: i32) -> (i32, i32) {
    %c0_i32 = arith.constant 0 : i32
    %c0_i32_0 = arith.constant 0 : i32
    %c0_i32_1 = arith.constant 0 : i32
    return %c0_i32, %c0_i32_0 : i32, i32
  }
  func.func @transform_9(%arg0: i32) -> (i32, i32) {
    %c0_i32 = arith.constant 0 : i32
    %c0_i32_0 = arith.constant 0 : i32
    %c0_i32_1 = arith.constant 0 : i32
    return %c0_i32, %c0_i32_0 : i32, i32
  }
  func.func @transform_10(%arg0: i32) -> (i32, i32) {
    %c0_i32 = arith.constant 0 : i32
    %c0_i32_0 = arith.constant 0 : i32
    %c0_i32_1 = arith.constant 0 : i32
    return %c0_i32, %c0_i32_0 : i32, i32
  }
  func.func @transform_11(%arg0: i32) -> (i32, i32) {
    %c0_i32 = arith.constant 0 : i32
    %c0_i32_0 = arith.constant 0 : i32
    %c0_i32_1 = arith.constant 0 : i32
    return %c0_i32, %c0_i32_0 : i32, i32
  }
  func.func @transform_12(%arg0: i32) -> (i32, i32) {
    %c0_i32 = arith.constant 0 : i32
    %c0_i32_0 = arith.constant 0 : i32
    %c0_i32_1 = arith.constant 0 : i32
    return %c0_i32, %c0_i32_0 : i32, i32
  }
  func.func @transform_13(%arg0: i32) -> (i32, i32) {
    %c0_i32 = arith.constant 0 : i32
    %c0_i32_0 = arith.constant 0 : i32
    %c0_i32_1 = arith.constant 0 : i32
    return %c0_i32, %c0_i32_0 : i32, i32
  }
  func.func @transform_14(%arg0: i32) -> (i32, i32) {
    %c0_i32 = arith.constant 0 : i32
    %c0_i32_0 = arith.constant 0 : i32
    %c0_i32_1 = arith.constant 0 : i32
    return %c0_i32, %c0_i32_0 : i32, i32
  }
  func.func @transform_15(%arg0: i32) -> (i32, i32) {
    %c0_i32 = arith.constant 0 : i32
    %c0_i32_0 = arith.constant 0 : i32
    %c0_i32_1 = arith.constant 0 : i32
    return %c0_i32, %c0_i32_0 : i32, i32
  }
  func.func @transform_16(%arg0: i32) -> (i32, i32) {
    %c0_i32 = arith.constant 0 : i32
    %c0_i32_0 = arith.constant 0 : i32
    %c0_i32_1 = arith.constant 0 : i32
    return %c0_i32, %c0_i32_0 : i32, i32
  }
  func.func @transform_17(%arg0: i32) -> (i32, i32) {
    %c0_i32 = arith.constant 0 : i32
    %c0_i32_0 = arith.constant 0 : i32
    %c0_i32_1 = arith.constant 0 : i32
    return %c0_i32, %c0_i32_0 : i32, i32
  }
  func.func @transform_18(%arg0: i32) -> (i32, i32) {
    %c0_i32 = arith.constant 0 : i32
    %c0_i32_0 = arith.constant 0 : i32
    %c0_i32_1 = arith.constant 0 : i32
    return %c0_i32, %c0_i32_0 : i32, i32
  }
  func.func @transform_19(%arg0: i32) -> (i32, i32) {
    %c0_i32 = arith.constant 0 : i32
    %c0_i32_0 = arith.constant 0 : i32
    %c0_i32_1 = arith.constant 0 : i32
    return %c0_i32, %c0_i32_0 : i32, i32
  }
  func.func @transform_20(%arg0: i32) -> (i32, i32) {
    %c0_i32 = arith.constant 0 : i32
    %c0_i32_0 = arith.constant 0 : i32
    %c0_i32_1 = arith.constant 0 : i32
    return %c0_i32, %c0_i32_0 : i32, i32
  }
  func.func @transform_21(%arg0: i32) -> (i32, i32) {
    %c0_i32 = arith.constant 0 : i32
    %c0_i32_0 = arith.constant 0 : i32
    return %arg0, %c0_i32 : i32, i32
  }
}

</mosaic_0001>

<llo_original>
// kernel: tpu_custom_call.1
$region0: #{tpu_custom_call.1}
  #allocation0 [shape = 'u32[]', space=smem, size = 0x4, offset = 0x4, fixed_abs, tag = 'smem constant byte address 0x4 - core index']
  #allocation1 [shape = 'u32[144,128]{1,0:T(1,128)}', space=vmem, size = 0x12000, scoped, tag = 'internal scratch']
  %s0 = inlined_call_operand.vmem [shape: f32[2,8,4], index: 0, kind: input, shape index: {}]
  %s1 = inlined_call_operand.hbm [shape: f32[2,8], index: 1, kind: input, shape index: {}]
  %s2 = inlined_call_operand.vmem [shape: f32[2,1], index: 2, kind: input, shape index: {}]
  %s3 = inlined_call_operand.vmem [shape: f32[2,1], index: 3, kind: input, shape index: {}]
  %s4 = inlined_call_operand.hbm [shape: f32[4,32], index: 4, kind: input, shape index: {}]
  %s5 = inlined_call_operand.hbm [shape: f32[1,32], index: 5, kind: input, shape index: {}]
  %s6 = inlined_call_operand.hbm [shape: f32[1,32], index: 6, kind: input, shape index: {}]
  %s7 = inlined_call_operand.hbm [shape: f32[1,32], index: 7, kind: input, shape index: {}]
  %s8 = inlined_call_operand.vmem [shape: f32[32,32], index: 8, kind: input, shape index: {}]
  %s9 = inlined_call_operand.hbm [shape: f32[1,32], index: 9, kind: input, shape index: {}]
  %s10 = inlined_call_operand.hbm [shape: f32[1,32], index: 10, kind: input, shape index: {}]
  %s11 = inlined_call_operand.hbm [shape: f32[1,32], index: 11, kind: input, shape index: {}]
  %s12 = inlined_call_operand.hbm [shape: f32[16,64], index: 12, kind: input, shape index: {}]
  %s13 = inlined_call_operand.hbm [shape: f32[1,64], index: 13, kind: input, shape index: {}]
  %s14 = inlined_call_operand.hbm [shape: f32[1,64], index: 14, kind: input, shape index: {}]
  %s15 = inlined_call_operand.hbm [shape: f32[64,64], index: 15, kind: input, shape index: {}]
  %s16 = inlined_call_operand.hbm [shape: f32[1,64], index: 16, kind: input, shape index: {}]
  %s17 = inlined_call_operand.hbm [shape: f32[32,32], index: 17, kind: input, shape index: {}]
  %s18 = inlined_call_operand.hbm [shape: f32[1,32], index: 18, kind: input, shape index: {}]
  %s19 = inlined_call_operand.vmem [shape: f32[32,64], index: 19, kind: input, shape index: {}]
  %s20 = inlined_call_operand.vmem [shape: f32[1,64], index: 20, kind: input, shape index: {}]
  %s21 = inlined_call_operand.hbm [shape: f32[2,256], index: 21, kind: output, shape index: {}]
  %s22 = sld [smem:[#allocation0]]
  $region154: #{tpu_custom_call.1} parent=0
    _
  %s24 = ssub.s32 1, %s22
  %s25 = scalar_select 0, %s24, %s22
  $region1: #{tpu_custom_call.1} parent=0
    #allocation2 [shape = 'u8[1024]{0}', space=vmem, size = 0x400, scoped, tag = 'input window, operand 1, single buffered']
    #allocation3 [shape = 's32[1]{0}', space=sflag, size = 0x4, scoped, tag = 'scoped memory for tpu_custom_call.1']
    #allocation4 [shape = 's32[1]{0}', space=sflag, size = 0x4, scoped, tag = 'scoped memory for tpu_custom_call.1']
    #allocation5 [shape = 'u8[2048]{0}', space=vmem, size = 0x800, scoped, tag = 'input window, operand 4, single buffered']
    #allocation6 [shape = 's32[1]{0}', space=sflag, size = 0x4, scoped, tag = 'scoped memory for tpu_custom_call.1']
    #allocation7 [shape = 'u8[512]{0}', space=vmem, size = 0x400, scoped, tag = 'input window, operand 5, single buffered']
    #allocation8 [shape = 'u8[512]{0}', space=vmem, size = 0x400, scoped, tag = 'input window, operand 6, single buffered']
    #allocation9 [shape = 's32[1]{0}', space=sflag, size = 0x4, scoped, tag = 'scoped memory for tpu_custom_call.1']
    #allocation10 [shape = 'u8[512]{0}', space=vmem, size = 0x400, scoped, tag = 'input window, operand 7, single buffered']
    #allocation11 [shape = 'u8[512]{0}', space=vmem, size = 0x400, scoped, tag = 'input window, operand 9, single buffered']
    #allocation12 [shape = 's32[1]{0}', space=sflag, size = 0x4, scoped, tag = 'scoped memory for tpu_custom_call.1']
    #allocation13 [shape = 'u8[512]{0}', space=vmem, size = 0x400, scoped, tag = 'input window, operand 10, single buffered']
    #allocation14 [shape = 'u8[512]{0}', space=vmem, size = 0x400, scoped, tag = 'input window, operand 11, single buffered']
    #allocation15 [shape = 's32[1]{0}', space=sflag, size = 0x4, scoped, tag = 'scoped memory for tpu_custom_call.1']
    #allocation16 [shape = 'u8[8192]{0}', space=vmem, size = 0x2000, scoped, tag = 'input window, operand 12, single buffered']
    #allocation17 [shape = 'u8[512]{0}', space=vmem, size = 0x400, scoped, tag = 'input window, operand 13, single buffered']
    #allocation18 [shape = 's32[1]{0}', space=sflag, size = 0x4, scoped, tag = 'scoped memory for tpu_custom_call.1']
    #allocation19 [shape = 'u8[512]{0}', space=vmem, size = 0x400, scoped, tag = 'input window, operand 14, single buffered']
    #allocation20 [shape = 'u8[32768]{0}', space=vmem, size = 0x8000, scoped, tag = 'input window, operand 15, single buffered']
    #allocation21 [shape = 's32[1]{0}', space=sflag, size = 0x4, scoped, tag = 'scoped memory for tpu_custom_call.1']
    #allocation22 [shape = 'u8[512]{0}', space=vmem, size = 0x400, scoped, tag = 'input window, operand 16, single buffered']
    #allocation23 [shape = 'u8[16384]{0}', space=vmem, size = 0x4000, scoped, tag = 'input window, operand 17, single buffered']
    #allocation24 [shape = 's32[1]{0}', space=sflag, size = 0x4, scoped, tag = 'scoped memory for tpu_custom_call.1']
    #allocation25 [shape = 'u8[512]{0}', space=vmem, size = 0x400, scoped, tag = 'input window, operand 18, single buffered']
    #allocation26 [shape = 'u8[2048]{0}', space=vmem, size = 0x800, scoped, tag = 'output window, operand 0, single buffered']
    %26 = vsyncpa [#allocation3], 0
    %27 = vsyncpa [#allocation6], 0
    %28 = vsyncpa [#allocation9], 0
    %29 = vsyncpa [#allocation12], 0
    %30 = vsyncpa [#allocation15], 0
    %31 = vsyncpa [#allocation18], 0
    %32 = vsyncpa [#allocation21], 0
    %33 = vsyncpa [#allocation24], 0
    %34 = vsyncpa [#allocation4], 0
    // Predicated region
    $region2: #{tpu_custom_call.1} parent=1 // pred_check
      _
    $region3: #{tpu_custom_call.1} parent=1 // pred_check_branch
      %36 = sbr.rel (0) target = $region5
    $region4: #{tpu_custom_call.1} parent=1 // pred_region
      _
    $region5: #{tpu_custom_call.1} parent=1 // pred_fallthru
      _
    // Predicated region
    $region6: #{tpu_custom_call.1} parent=1 // pred_check
      _
    $region7: #{tpu_custom_call.1} parent=1 // pred_check_branch
      %38 = sbr.rel (0) target = $region9
    $region8: #{tpu_custom_call.1} parent=1 // pred_region
      %s40 = ssub.s32 32, 32
      %41 = vsyncadd [#allocation3], %s40
      %s43 = sshll.u32 [#allocation2], 4
      %s44 = int_to_ptr.vmem [resolvable:$true] %s43
      %46 = dma.hbm_to_vmem [thread:$0]  %s1, 32, %s44, [#allocation3]
    $region9: #{tpu_custom_call.1} parent=1 // pred_fallthru
      _
    // Predicated region
    $region10: #{tpu_custom_call.1} parent=1 // pred_check
      _
    $region11: #{tpu_custom_call.1} parent=1 // pred_check_branch
      %48 = sbr.rel (0) target = $region13
    $region12: #{tpu_custom_call.1} parent=1 // pred_region
      _
    $region13: #{tpu_custom_call.1} parent=1 // pred_fallthru
      _
    // Predicated region
    $region14: #{tpu_custom_call.1} parent=1 // pred_check
      _
    $region15: #{tpu_custom_call.1} parent=1 // pred_check_branch
      %50 = sbr.rel (0) target = $region17
    $region16: #{tpu_custom_call.1} parent=1 // pred_region
      _
    $region17: #{tpu_custom_call.1} parent=1 // pred_fallthru
      _
    // Predicated region
    $region18: #{tpu_custom_call.1} parent=1 // pred_check
      _
    $region19: #{tpu_custom_call.1} parent=1 // pred_check_branch
      %52 = sbr.rel (0) target = $region21
    $region20: #{tpu_custom_call.1} parent=1 // pred_region
      %s54 = ssub.s32 64, 64
      %55 = vsyncadd [#allocation6], %s54
      %s57 = sshll.u32 [#allocation5], 4
      %s58 = int_to_ptr.vmem [resolvable:$true] %s57
      %60 = dma.hbm_to_vmem [thread:$0]  %s4, 64, %s58, [#allocation6]
    $region21: #{tpu_custom_call.1} parent=1 // pred_fallthru
      _
    // Predicated region
    $region22: #{tpu_custom_call.1} parent=1 // pred_check
      _
    $region23: #{tpu_custom_call.1} parent=1 // pred_check_branch
      %62 = sbr.rel (0) target = $region25
    $region24: #{tpu_custom_call.1} parent=1 // pred_region
      %s64 = ssub.s32 16, 16
      %65 = vsyncadd [#allocation6], %s64
      %s67 = sshll.u32 [#allocation7], 4
      %s68 = int_to_ptr.vmem [resolvable:$true] %s67
      %70 = dma.hbm_to_vmem [thread:$0]  %s5, 16, %s68, [#allocation6]
    $region25: #{tpu_custom_call.1} parent=1 // pred_fallthru
      _
    // Predicated region
    $region26: #{tpu_custom_call.1} parent=1 // pred_check
      _
    $region27: #{tpu_custom_call.1} parent=1 // pred_check_branch
      %72 = sbr.rel (0) target = $region29
    $region28: #{tpu_custom_call.1} parent=1 // pred_region
      %s74 = ssub.s32 16, 16
      %75 = vsyncadd [#allocation9], %s74
      %s77 = sshll.u32 [#allocation8], 4
      %s78 = int_to_ptr.vmem [resolvable:$true] %s77
      %80 = dma.hbm_to_vmem [thread:$0]  %s6, 16, %s78, [#allocation9]
    $region29: #{tpu_custom_call.1} parent=1 // pred_fallthru
      _
    // Predicated region
    $region30: #{tpu_custom_call.1} parent=1 // pred_check
      _
    $region31: #{tpu_custom_call.1} parent=1 // pred_check_branch
      %82 = sbr.rel (0) target = $region33
    $region32: #{tpu_custom_call.1} parent=1 // pred_region
      %s84 = ssub.s32 16, 16
      %85 = vsyncadd [#allocation9], %s84
      %s87 = sshll.u32 [#allocation10], 4
      %s88 = int_to_ptr.vmem [resolvable:$true] %s87
      %90 = dma.hbm_to_vmem [thread:$0]  %s7, 16, %s88, [#allocation9]
    $region33: #{tpu_custom_call.1} parent=1 // pred_fallthru
      _
    // Predicated region
    $region34: #{tpu_custom_call.1} parent=1 // pred_check
      _
    $region35: #{tpu_custom_call.1} parent=1 // pred_check_branch
      %92 = sbr.rel (0) target = $region37
    $region36: #{tpu_custom_call.1} parent=1 // pred_region
      _
    $region37: #{tpu_custom_call.1} parent=1 // pred_fallthru
      _
    // Predicated region
    $region38: #{tpu_custom_call.1} parent=1 // pred_check
      _
    $region39: #{tpu_custom_call.1} parent=1 // pred_check_branch
      %94 = sbr.rel (0) target = $region41
    $region40: #{tpu_custom_call.1} parent=1 // pred_region
      %s96 = ssub.s32 16, 16
      %97 = vsyncadd [#allocation12], %s96
      %s99 = sshll.u32 [#allocation11], 4
      %s100 = int_to_ptr.vmem [resolvable:$true] %s99
      %102 = dma.hbm_to_vmem [thread:$0]  %s9, 16, %s100, [#allocation12]
    $region41: #{tpu_custom_call.1} parent=1 // pred_fallthru
      _
    // Predicated region
    $region42: #{tpu_custom_call.1} parent=1 // pred_check
      _
    $region43: #{tpu_custom_call.1} parent=1 // pred_check_branch
      %104 = sbr.rel (0) target = $region45
    $region44: #{tpu_custom_call.1} parent=1 // pred_region
      %s106 = ssub.s32 16, 16
      %107 = vsyncadd [#allocation12], %s106
      %s109 = sshll.u32 [#allocation13], 4
      %s110 = int_to_ptr.vmem [resolvable:$true] %s109
      %112 = dma.hbm_to_vmem [thread:$0]  %s10, 16, %s110, [#allocation12]
    $region45: #{tpu_custom_call.1} parent=1 // pred_fallthru
      _
    // Predicated region
    $region46: #{tpu_custom_call.1} parent=1 // pred_check
      _
    $region47: #{tpu_custom_call.1} parent=1 // pred_check_branch
      %114 = sbr.rel (0) target = $region49
    $region48: #{tpu_custom_call.1} parent=1 // pred_region
      %s116 = ssub.s32 16, 16
      %117 = vsyncadd [#allocation15], %s116
      %s119 = sshll.u32 [#allocation14], 4
      %s120 = int_to_ptr.vmem [resolvable:$true] %s119
      %122 = dma.hbm_to_vmem [thread:$0]  %s11, 16, %s120, [#allocation15]
    $region49: #{tpu_custom_call.1} parent=1 // pred_fallthru
      _
    // Predicated region
    $region50: #{tpu_custom_call.1} parent=1 // pred_check
      _
    $region51: #{tpu_custom_call.1} parent=1 // pred_check_branch
      %124 = sbr.rel (0) target = $region53
    $region52: #{tpu_custom_call.1} parent=1 // pred_region
      %s126 = ssub.s32 256, 256
      %127 = vsyncadd [#allocation15], %s126
      %s128 = sshll.u32 [#allocation16], 4
      %s129 = int_to_ptr.vmem [resolvable:$true] %s128
      %134 = dma.hbm_to_vmem [thread:$0]  %s12, 256, %s129, [#allocation15], 128, 128, 8
    $region53: #{tpu_custom_call.1} parent=1 // pred_fallthru
      _
    // Predicated region
    $region54: #{tpu_custom_call.1} parent=1 // pred_check
      _
    $region55: #{tpu_custom_call.1} parent=1 // pred_check_branch
      %136 = sbr.rel (0) target = $region57
    $region56: #{tpu_custom_call.1} parent=1 // pred_region
      %s138 = ssub.s32 16, 16
      %139 = vsyncadd [#allocation18], %s138
      %s141 = sshll.u32 [#allocation17], 4
      %s142 = int_to_ptr.vmem [resolvable:$true] %s141
      %144 = dma.hbm_to_vmem [thread:$0]  %s13, 16, %s142, [#allocation18]
    $region57: #{tpu_custom_call.1} parent=1 // pred_fallthru
      _
    // Predicated region
    $region58: #{tpu_custom_call.1} parent=1 // pred_check
      _
    $region59: #{tpu_custom_call.1} parent=1 // pred_check_branch
      %146 = sbr.rel (0) target = $region61
    $region60: #{tpu_custom_call.1} parent=1 // pred_region
      %s148 = ssub.s32 16, 16
      %149 = vsyncadd [#allocation18], %s148
      %s151 = sshll.u32 [#allocation19], 4
      %s152 = int_to_ptr.vmem [resolvable:$true] %s151
      %154 = dma.hbm_to_vmem [thread:$0]  %s14, 16, %s152, [#allocation18]
    $region61: #{tpu_custom_call.1} parent=1 // pred_fallthru
      _
    // Predicated region
    $region62: #{tpu_custom_call.1} parent=1 // pred_check
      _
    $region63: #{tpu_custom_call.1} parent=1 // pred_check_branch
      %156 = sbr.rel (0) target = $region65
    $region64: #{tpu_custom_call.1} parent=1 // pred_region
      %s158 = ssub.s32 1024, 1024
      %159 = vsyncadd [#allocation21], %s158
      %s160 = sshll.u32 [#allocation20], 4
      %s161 = int_to_ptr.vmem [resolvable:$true] %s160
      %166 = dma.hbm_to_vmem [thread:$0]  %s15, 1024, %s161, [#allocation21], 128, 128, 8
    $region65: #{tpu_custom_call.1} parent=1 // pred_fallthru
      _
    // Predicated region
    $region66: #{tpu_custom_call.1} parent=1 // pred_check
      _
    $region67: #{tpu_custom_call.1} parent=1 // pred_check_branch
      %168 = sbr.rel (0) target = $region69
    $region68: #{tpu_custom_call.1} parent=1 // pred_region
      %s170 = ssub.s32 16, 16
      %171 = vsyncadd [#allocation21], %s170
      %s173 = sshll.u32 [#allocation22], 4
      %s174 = int_to_ptr.vmem [resolvable:$true] %s173
      %176 = dma.hbm_to_vmem [thread:$0]  %s16, 16, %s174, [#allocation21]
    $region69: #{tpu_custom_call.1} parent=1 // pred_fallthru
      _
    // Predicated region
    $region70: #{tpu_custom_call.1} parent=1 // pred_check
      _
    $region71: #{tpu_custom_call.1} parent=1 // pred_check_branch
      %178 = sbr.rel (0) target = $region73
    $region72: #{tpu_custom_call.1} parent=1 // pred_region
      %s180 = ssub.s32 512, 512
      %181 = vsyncadd [#allocation24], %s180
      %s182 = sshll.u32 [#allocation23], 4
      %s183 = int_to_ptr.vmem [resolvable:$true] %s182
      %188 = dma.hbm_to_vmem [thread:$0]  %s17, 512, %s183, [#allocation24], 128, 128, 8
    $region73: #{tpu_custom_call.1} parent=1 // pred_fallthru
      _
    // Predicated region
    $region74: #{tpu_custom_call.1} parent=1 // pred_check
      _
    $region75: #{tpu_custom_call.1} parent=1 // pred_check_branch
      %190 = sbr.rel (0) target = $region77
    $region76: #{tpu_custom_call.1} parent=1 // pred_region
      %s192 = ssub.s32 16, 16
      %193 = vsyncadd [#allocation24], %s192
      %s195 = sshll.u32 [#allocation25], 4
      %s196 = int_to_ptr.vmem [resolvable:$true] %s195
      %198 = dma.hbm_to_vmem [thread:$0]  %s18, 16, %s196, [#allocation24]
    $region77: #{tpu_custom_call.1} parent=1 // pred_fallthru
      _
    // Predicated region
    $region78: #{tpu_custom_call.1} parent=1 // pred_check
      _
    $region79: #{tpu_custom_call.1} parent=1 // pred_check_branch
      %200 = sbr.rel (0) target = $region81
    $region80: #{tpu_custom_call.1} parent=1 // pred_region
      _
    $region81: #{tpu_custom_call.1} parent=1 // pred_fallthru
      _
    // Predicated region
    $region82: #{tpu_custom_call.1} parent=1 // pred_check
      _
    $region83: #{tpu_custom_call.1} parent=1 // pred_check_branch
      %202 = sbr.rel (0) target = $region85
    $region84: #{tpu_custom_call.1} parent=1 // pred_region
      _
    $region85: #{tpu_custom_call.1} parent=1 // pred_fallthru
      _
    // Predicated region
    $region86: #{tpu_custom_call.1} parent=1 // pred_check
      _
    $region87: #{tpu_custom_call.1} parent=1 // pred_check_branch
      %204 = sbr.rel (0) target = $region89
    $region88: #{tpu_custom_call.1} parent=1 // pred_region
      %205 = dma.done [#allocation3], 32
    $region89: #{tpu_custom_call.1} parent=1 // pred_fallthru
      _
    // Predicated region
    $region90: #{tpu_custom_call.1} parent=1 // pred_check
      _
    $region91: #{tpu_custom_call.1} parent=1 // pred_check_branch
      %207 = sbr.rel (0) target = $region93
    $region92: #{tpu_custom_call.1} parent=1 // pred_region
      %208 = dma.done [#allocation6], 64
    $region93: #{tpu_custom_call.1} parent=1 // pred_fallthru
      _
    // Predicated region
    $region94: #{tpu_custom_call.1} parent=1 // pred_check
      _
    $region95: #{tpu_custom_call.1} parent=1 // pred_check_branch
      %210 = sbr.rel (0) target = $region97
    $region96: #{tpu_custom_call.1} parent=1 // pred_region
      %211 = dma.done [#allocation6], 16
    $region97: #{tpu_custom_call.1} parent=1 // pred_fallthru
      _
    // Predicated region
    $region98: #{tpu_custom_call.1} parent=1 // pred_check
      _
    $region99: #{tpu_custom_call.1} parent=1 // pred_check_branch
      %213 = sbr.rel (0) target = $region101
    $region100: #{tpu_custom_call.1} parent=1 // pred_region
      %214 = dma.done [#allocation9], 16
    $region101: #{tpu_custom_call.1} parent=1 // pred_fallthru
      _
    // Predicated region
    $region102: #{tpu_custom_call.1} parent=1 // pred_check
      _
    $region103: #{tpu_custom_call.1} parent=1 // pred_check_branch
      %216 = sbr.rel (0) target = $region105
    $region104: #{tpu_custom_call.1} parent=1 // pred_region
      %217 = dma.done [#allocation9], 16
    $region105: #{tpu_custom_call.1} parent=1 // pred_fallthru
      _
    // Predicated region
    $region106: #{tpu_custom_call.1} parent=1 // pred_check
      _
    $region107: #{tpu_custom_call.1} parent=1 // pred_check_branch
      %219 = sbr.rel (0) target = $region109
    $region108: #{tpu_custom_call.1} parent=1 // pred_region
      %220 = dma.done [#allocation12], 16
    $region109: #{tpu_custom_call.1} parent=1 // pred_fallthru
      _
    // Predicated region
    $region110: #{tpu_custom_call.1} parent=1 // pred_check
      _
    $region111: #{tpu_custom_call.1} parent=1 // pred_check_branch
      %222 = sbr.rel (0) target = $region113
    $region112: #{tpu_custom_call.1} parent=1 // pred_region
      %223 = dma.done [#allocation12], 16
    $region113: #{tpu_custom_call.1} parent=1 // pred_fallthru
      _
    // Predicated region
    $region114: #{tpu_custom_call.1} parent=1 // pred_check
      _
    $region115: #{tpu_custom_call.1} parent=1 // pred_check_branch
      %225 = sbr.rel (0) target = $region117
    $region116: #{tpu_custom_call.1} parent=1 // pred_region
      %226 = dma.done [#allocation15], 16
    $region117: #{tpu_custom_call.1} parent=1 // pred_fallthru
      _
    // Predicated region
    $region118: #{tpu_custom_call.1} parent=1 // pred_check
      _
    $region119: #{tpu_custom_call.1} parent=1 // pred_check_branch
      %228 = sbr.rel (0) target = $region121
    $region120: #{tpu_custom_call.1} parent=1 // pred_region
      %229 = dma.done [#allocation15], 256
    $region121: #{tpu_custom_call.1} parent=1 // pred_fallthru
      _
    // Predicated region
    $region122: #{tpu_custom_call.1} parent=1 // pred_check
      _
    $region123: #{tpu_custom_call.1} parent=1 // pred_check_branch
      %231 = sbr.rel (0) target = $region125
    $region124: #{tpu_custom_call.1} parent=1 // pred_region
      %232 = dma.done [#allocation18], 16
    $region125: #{tpu_custom_call.1} parent=1 // pred_fallthru
      _
    // Predicated region
    $region126: #{tpu_custom_call.1} parent=1 // pred_check
      _
    $region127: #{tpu_custom_call.1} parent=1 // pred_check_branch
      %234 = sbr.rel (0) target = $region129
    $region128: #{tpu_custom_call.1} parent=1 // pred_region
      %235 = dma.done [#allocation18], 16
    $region129: #{tpu_custom_call.1} parent=1 // pred_fallthru
      _
    // Predicated region
    $region130: #{tpu_custom_call.1} parent=1 // pred_check
      _
    $region131: #{tpu_custom_call.1} parent=1 // pred_check_branch
      %237 = sbr.rel (0) target = $region133
    $region132: #{tpu_custom_call.1} parent=1 // pred_region
      %238 = dma.done [#allocation21], 1024
    $region133: #{tpu_custom_call.1} parent=1 // pred_fallthru
      _
    // Predicated region
    $region134: #{tpu_custom_call.1} parent=1 // pred_check
      _
    $region135: #{tpu_custom_call.1} parent=1 // pred_check_branch
      %240 = sbr.rel (0) target = $region137
    $region136: #{tpu_custom_call.1} parent=1 // pred_region
      %241 = dma.done [#allocation21], 16
    $region137: #{tpu_custom_call.1} parent=1 // pred_fallthru
      _
    // Predicated region
    $region138: #{tpu_custom_call.1} parent=1 // pred_check
      _
    $region139: #{tpu_custom_call.1} parent=1 // pred_check_branch
      %243 = sbr.rel (0) target = $region141
    $region140: #{tpu_custom_call.1} parent=1 // pred_region
      %244 = dma.done [#allocation24], 512
    $region141: #{tpu_custom_call.1} parent=1 // pred_fallthru
      _
    // Predicated region
    $region142: #{tpu_custom_call.1} parent=1 // pred_check
      _
    $region143: #{tpu_custom_call.1} parent=1 // pred_check_branch
      %246 = sbr.rel (0) target = $region145
    $region144: #{tpu_custom_call.1} parent=1 // pred_region
      %247 = dma.done [#allocation24], 16
    $region145: #{tpu_custom_call.1} parent=1 // pred_fallthru
      _
    %v248 = vld [vmem:[%s0] sm:$0xff]
    %v249 = vld [vmem:[%s0 + $0x8] sm:$0xff]
    %v250 = vld [vmem:[#allocation2] sm:$0x3]
    %v251 = vld [vmem:[%s2] sm:$0x3]
    %v252 = vld [vmem:[%s3] sm:$0x3]
    %v253 = vlaneseq
    %v254 = vshrl.u32 %v253, 7
    %v255 = vsub.s32 0, %v254
    %v256 = vrot.slane %v250, %v255
    %258 = vbcast.lane.b32.xlu0 %v256, 256
    %v259 = vpop.permute.xlu0 %258
    %v260 = vlaneseq
    %v261 = vshrl.u32 %v260, 7
    %v262 = vsub.s32 1, %v261
    %v263 = vrot.slane %v250, %v262
    %265 = vbcast.lane.b32.xlu0 %v263, 256
    %v266 = vpop.permute.xlu0 %265
    %v267 = vmul.f32 %v259, %v248
    %v268 = vmul.f32 %v266, %v249
    %vm269 = vcmask 31744
    %v270 = vsel %vm269, %v267, 0.0
    %v271 = vrot.slane %v270, 4
    %v272 = vadd.f32 %v270, %v271
    %v273 = vrot.slane %v272, 2
    %v274 = vadd.f32 %v272, %v273
    %v275 = vrot.slane %v274, 1
    %v276 = vadd.f32 %v274, %v275
    %v277 = vsel %vm269, %v268, 0.0
    %v278 = vrot.slane %v277, 4
    %v279 = vadd.f32 %v277, %v278
    %v280 = vrot.slane %v279, 2
    %v281 = vadd.f32 %v279, %v280
    %v282 = vrot.slane %v281, 1
    %v283 = vadd.f32 %v281, %v282
    %v284 = vld [vmem:[#allocation5] sm:$0xf]
    %v285 = vld [vmem:[#allocation7] sm:$0x1]
    %v286 = vmul.f32 %v285, 8.0
    %v288 = vlaneseq
    %v289 = vshrl.u32 %v288, 7
    %v290 = vsub.s32 0, %v289
    %v291 = vrot.slane %v286, %v290
    %vm295 = vcmask 1041409
    %v296 = vsel %vm295, %v283, %v276
    %v297 = vsel %vm269, %v296, 0
    %vm299 = vcmask 1043456
    %v301 = vsel %vm299, %v284, 0
    %303 = vmatprep.subr.mxu0 0.0
    %304 = vmatpush1.msra.mxu0 0.0
    %305 = vmatprep.subr.mxu0 0.0
    %306 = vmatpush1.msra.mxu0 0.0
    %307 = vmatprep.subr.mxu0 0.0
    %308 = vmatpush1.msra.mxu0 0.0
    %309 = vmatprep.subr.mxu0 0.0
    %310 = vmatpush1.msra.mxu0 0.0
    %311 = vmatprep.subr.mxu0 0.0
    %312 = vmatpush1.msra.mxu0 0.0
    %313 = vmatprep.subr.mxu0 0.0
    %314 = vmatpush1.msra.mxu0 0.0
    %315 = vmatprep.subr.mxu0 0.0
    %316 = vmatpush1.msra.mxu0 0.0
    %317 = vmatprep.subr.mxu0 0.0
    %318 = vmatpush1.msra.mxu0 0.0
    %319 = vmatprep.subr.mxu0 0.0
    %320 = vmatpush1.msra.mxu0 0.0
    %321 = vmatprep.subr.mxu0 0.0
    %322 = vmatpush1.msra.mxu0 0.0
    %323 = vmatprep.subr.mxu0 0.0
    %324 = vmatpush1.msra.mxu0 0.0
    %325 = vmatprep.subr.mxu0 0.0
    %326 = vmatpush1.msra.mxu0 0.0
    %327 = vmatprep.subr.mxu0 0.0
    %328 = vmatpush1.msra.mxu0 0.0
    %329 = vmatprep.subr.mxu0 0.0
    %330 = vmatpush1.msra.mxu0 0.0
    %331 = vmatprep.subr.mxu0 0.0
    %332 = vmatpush1.msra.mxu0 0.0
    %333 = vmatprep.subr.mxu0 0.0
    %334 = vmatpush1.msra.mxu0 %v301
    %335 = vmatprep.subr.mxu0 0.0
    %336 = vmatpush2.msra.mxu0 0.0
    %337 = vmatprep.subr.mxu0 0.0
    %338 = vmatpush2.msra.mxu0 0.0
    %339 = vmatprep.subr.mxu0 0.0
    %340 = vmatpush2.msra.mxu0 0.0
    %341 = vmatprep.subr.mxu0 0.0
    %342 = vmatpush2.msra.mxu0 0.0
    %343 = vmatprep.subr.mxu0 0.0
    %344 = vmatpush2.msra.mxu0 0.0
    %345 = vmatprep.subr.mxu0 0.0
    %346 = vmatpush2.msra.mxu0 0.0
    %347 = vmatprep.subr.mxu0 0.0
    %348 = vmatpush2.msra.mxu0 0.0
    %349 = vmatprep.subr.mxu0 0.0
    %350 = vmatpush2.msra.mxu0 0.0
    %351 = vmatprep.subr.mxu0 0.0
    %352 = vmatpush2.msra.mxu0 0.0
    %353 = vmatprep.subr.mxu0 0.0
    %354 = vmatpush2.msra.mxu0 0.0
    %355 = vmatprep.subr.mxu0 0.0
    %356 = vmatpush2.msra.mxu0 0.0
    %357 = vmatprep.subr.mxu0 0.0
    %358 = vmatpush2.msra.mxu0 0.0
    %359 = vmatprep.subr.mxu0 0.0
    %360 = vmatpush2.msra.mxu0 0.0
    %361 = vmatprep.subr.mxu0 0.0
    %362 = vmatpush2.msra.mxu0 0.0
    %363 = vmatprep.subr.mxu0 0.0
    %364 = vmatpush2.msra.mxu0 0.0
    %365 = vmatprep.subr.mxu0 0.0
    %366 = vmatpush2.msra.mxu0 0.0
    %367 = vmatprep.mubr.f32.mxu0 0.0
    %368 = vmatmul.mubr.f32.gmra.mxu0 %v297
    %v369 = vpop.f32.mrf.mxu0
    %v370 = vadd.f32 %v291, %v369
    %v371 = vpop.f32.mrf.mxu0
    %372 = vdwg.mxu0
    %v373 = vld [vmem:[#allocation8] sm:$0x1]
    %375 = vset.pattern.permute.xlu0 0
    %376 = vperm.xlu0 %375, %v251
    %v377 = vpop.permute.xlu0 %376
    %v380 = vlaneseq
    %v381 = vshrl.u32 %v380, 7
    %v382 = vsub.s32 0, %v381
    %v383 = vrot.slane %v373, %v382
    %v385 = vmul.f32 %v377, %v383
    %v386 = vld [vmem:[#allocation10] sm:$0x1]
    %v388 = vlaneseq
    %v389 = vshrl.u32 %v388, 7
    %v390 = vsub.s32 0, %v389
    %v391 = vrot.slane %v386, %v390
    %v393 = vadd.f32 %v385, %v391
    %v394 = vxor.u32 %v393, 2147483648
    %v395 = vmul.f32 %v394, 1.442695
    %v396 = vpow.pop %v395
    %v397 = vadd.f32 %v396, 1.0
    %v398 = vrcp.pop %v397
    %v399 = vmul.f32 1.0, %v398
    %v400 = vld [vmem:[%s8] sm:$0xff]
    %v401 = vld [vmem:[%s8 + $0x8] sm:$0xff]
    %v402 = vld [vmem:[%s8 + $0x10] sm:$0xff]
    %v403 = vld [vmem:[%s8 + $0x18] sm:$0xff]
    %v404 = vld [vmem:[#allocation11] sm:$0x1]
    %v406 = vlaneseq
    %v407 = vshrl.u32 %v406, 7
    %v408 = vsub.s32 0, %v407
    %v409 = vrot.slane %v404, %v408
    %v411 = vmul.f32 %v377, %v409
    %vm412 = vcmask 261120
    %v414 = vsel %vm412, %v370, 0
    %416 = vmatprep.subr.mxu0 0.0
    %417 = vmatpush1.msra.mxu0 0.0
    %418 = vmatprep.subr.mxu0 0.0
    %419 = vmatpush1.msra.mxu0 0.0
    %420 = vmatprep.subr.mxu0 0.0
    %421 = vmatpush1.msra.mxu0 0.0
    %422 = vmatprep.subr.mxu0 0.0
    %423 = vmatpush1.msra.mxu0 0.0
    %424 = vmatprep.subr.mxu0 0.0
    %425 = vmatpush1.msra.mxu0 0.0
    %426 = vmatprep.subr.mxu0 0.0
    %427 = vmatpush1.msra.mxu0 0.0
    %428 = vmatprep.subr.mxu0 0.0
    %429 = vmatpush1.msra.mxu0 0.0
    %430 = vmatprep.subr.mxu0 0.0
    %431 = vmatpush1.msra.mxu0 0.0
    %432 = vmatprep.subr.mxu0 0.0
    %433 = vmatpush1.msra.mxu0 0.0
    %434 = vmatprep.subr.mxu0 0.0
    %435 = vmatpush1.msra.mxu0 0.0
    %436 = vmatprep.subr.mxu0 0.0
    %437 = vmatpush1.msra.mxu0 0.0
    %438 = vmatprep.subr.mxu0 0.0
    %439 = vmatpush1.msra.mxu0 0.0
    %440 = vmatprep.subr.mxu0 0.0
    %441 = vmatpush1.msra.mxu0 %v403
    %442 = vmatprep.subr.mxu0 0.0
    %443 = vmatpush1.msra.mxu0 %v402
    %444 = vmatprep.subr.mxu0 0.0
    %445 = vmatpush1.msra.mxu0 %v401
    %446 = vmatprep.subr.mxu0 0.0
    %447 = vmatpush1.msra.mxu0 %v400
    %448 = vmatprep.subr.mxu0 0.0
    %449 = vmatpush2.msra.mxu0 0.0
    %450 = vmatprep.subr.mxu0 0.0
    %451 = vmatpush2.msra.mxu0 0.0
    %452 = vmatprep.subr.mxu0 0.0
    %453 = vmatpush2.msra.mxu0 0.0
    %454 = vmatprep.subr.mxu0 0.0
    %455 = vmatpush2.msra.mxu0 0.0
    %456 = vmatprep.subr.mxu0 0.0
    %457 = vmatpush2.msra.mxu0 0.0
    %458 = vmatprep.subr.mxu0 0.0
    %459 = vmatpush2.msra.mxu0 0.0
    %460 = vmatprep.subr.mxu0 0.0
    %461 = vmatpush2.msra.mxu0 0.0
    %462 = vmatprep.subr.mxu0 0.0
    %463 = vmatpush2.msra.mxu0 0.0
    %464 = vmatprep.subr.mxu0 0.0
    %465 = vmatpush2.msra.mxu0 0.0
    %466 = vmatprep.subr.mxu0 0.0
    %467 = vmatpush2.msra.mxu0 0.0
    %468 = vmatprep.subr.mxu0 0.0
    %469 = vmatpush2.msra.mxu0 0.0
    %470 = vmatprep.subr.mxu0 0.0
    %471 = vmatpush2.msra.mxu0 0.0
    %472 = vmatprep.subr.mxu0 0.0
    %473 = vmatpush2.msra.mxu0 0.0
    %474 = vmatprep.subr.mxu0 0.0
    %475 = vmatpush2.msra.mxu0 0.0
    %476 = vmatprep.subr.mxu0 0.0
    %477 = vmatpush2.msra.mxu0 0.0
    %478 = vmatprep.subr.mxu0 0.0
    %479 = vmatpush2.msra.mxu0 0.0
    %480 = vmatprep.mubr.f32.mxu0 0.0
    %481 = vmatmul.mubr.f32.gmra.mxu0 %v414
    %v482 = vpop.f32.mrf.mxu0
    %v483 = vadd.f32 %v411, %v482
    %v484 = vpop.f32.mrf.mxu0
    %485 = vdwg.mxu0
    %v486 = vld [vmem:[#allocation13] sm:$0x1]
    %488 = vset.pattern.permute.xlu0 0
    %489 = vperm.xlu0 %488, %v252
    %v490 = vpop.permute.xlu0 %489
    %v493 = vlaneseq
    %v494 = vshrl.u32 %v493, 7
    %v495 = vsub.s32 0, %v494
    %v496 = vrot.slane %v486, %v495
    %v498 = vmul.f32 %v490, %v496
    %v499 = vadd.f32 %v483, %v498
    %v500 = vld [vmem:[#allocation14] sm:$0x1]
    %v502 = vlaneseq
    %v503 = vshrl.u32 %v502, 7
    %v504 = vsub.s32 0, %v503
    %v505 = vrot.slane %v500, %v504
    %v507 = vadd.f32 %v499, %v505
    %v508 = vmax.f32 %v507, 0.0
    %v509 = vxor.u32 %v508, 2147483648
    %v510 = vmul.f32 %v509, 1.442695
    %v511 = vpow.pop %v510
    %v512 = vadd.f32 %v511, 1.0
    %v513 = vrcp.pop %v512
    %v514 = vmul.f32 1.0, %v513
    %v515 = vld [vmem:[#allocation16] sm:$0xff]
    %v516 = vld [vmem:[#allocation16 + $0x8] sm:$0xff]
    %v517 = vld [vmem:[#allocation17] sm:$0x1]
    %v519 = vlaneseq
    %v520 = vshrl.u32 %v519, 7
    %v521 = vsub.s32 0, %v520
    %v522 = vrot.slane %v517, %v521
    %v524 = vmul.f32 %v490, %v522
    %vm525 = vcmask 130048
    %v527 = vsel %vm525, %v508, 0
    %529 = vmatprep.subr.mxu0 0.0
    %530 = vmatpush1.msra.mxu0 0.0
    %531 = vmatprep.subr.mxu0 0.0
    %532 = vmatpush1.msra.mxu0 0.0
    %533 = vmatprep.subr.mxu0 0.0
    %534 = vmatpush1.msra.mxu0 0.0
    %535 = vmatprep.subr.mxu0 0.0
    %536 = vmatpush1.msra.mxu0 0.0
    %537 = vmatprep.subr.mxu0 0.0
    %538 = vmatpush1.msra.mxu0 0.0
    %539 = vmatprep.subr.mxu0 0.0
    %540 = vmatpush1.msra.mxu0 0.0
    %541 = vmatprep.subr.mxu0 0.0
    %542 = vmatpush1.msra.mxu0 0.0
    %543 = vmatprep.subr.mxu0 0.0
    %544 = vmatpush1.msra.mxu0 0.0
    %545 = vmatprep.subr.mxu0 0.0
    %546 = vmatpush1.msra.mxu0 0.0
    %547 = vmatprep.subr.mxu0 0.0
    %548 = vmatpush1.msra.mxu0 0.0
    %549 = vmatprep.subr.mxu0 0.0
    %550 = vmatpush1.msra.mxu0 0.0
    %551 = vmatprep.subr.mxu0 0.0
    %552 = vmatpush1.msra.mxu0 0.0
    %553 = vmatprep.subr.mxu0 0.0
    %554 = vmatpush1.msra.mxu0 0.0
    %555 = vmatprep.subr.mxu0 0.0
    %556 = vmatpush1.msra.mxu0 0.0
    %557 = vmatprep.subr.mxu0 0.0
    %558 = vmatpush1.msra.mxu0 %v516
    %559 = vmatprep.subr.mxu0 0.0
    %560 = vmatpush1.msra.mxu0 %v515
    %561 = vmatprep.subr.mxu0 0.0
    %562 = vmatpush2.msra.mxu0 0.0
    %563 = vmatprep.subr.mxu0 0.0
    %564 = vmatpush2.msra.mxu0 0.0
    %565 = vmatprep.subr.mxu0 0.0
    %566 = vmatpush2.msra.mxu0 0.0
    %567 = vmatprep.subr.mxu0 0.0
    %568 = vmatpush2.msra.mxu0 0.0
    %569 = vmatprep.subr.mxu0 0.0
    %570 = vmatpush2.msra.mxu0 0.0
    %571 = vmatprep.subr.mxu0 0.0
    %572 = vmatpush2.msra.mxu0 0.0
    %573 = vmatprep.subr.mxu0 0.0
    %574 = vmatpush2.msra.mxu0 0.0
    %575 = vmatprep.subr.mxu0 0.0
    %576 = vmatpush2.msra.mxu0 0.0
    %577 = vmatprep.subr.mxu0 0.0
    %578 = vmatpush2.msra.mxu0 0.0
    %579 = vmatprep.subr.mxu0 0.0
    %580 = vmatpush2.msra.mxu0 0.0
    %581 = vmatprep.subr.mxu0 0.0
    %582 = vmatpush2.msra.mxu0 0.0
    %583 = vmatprep.subr.mxu0 0.0
    %584 = vmatpush2.msra.mxu0 0.0
    %585 = vmatprep.subr.mxu0 0.0
    %586 = vmatpush2.msra.mxu0 0.0
    %587 = vmatprep.subr.mxu0 0.0
    %588 = vmatpush2.msra.mxu0 0.0
    %589 = vmatprep.subr.mxu0 0.0
    %590 = vmatpush2.msra.mxu0 0.0
    %591 = vmatprep.subr.mxu0 0.0
    %592 = vmatpush2.msra.mxu0 0.0
    %593 = vmatprep.mubr.f32.mxu0 0.0
    %594 = vmatmul.mubr.f32.gmra.mxu0 %v527
    %v595 = vpop.f32.mrf.mxu0
    %v596 = vadd.f32 %v524, %v595
    %v597 = vpop.f32.mrf.mxu0
    %598 = vdwg.mxu0
    %v599 = vld [vmem:[#allocation19] sm:$0x1]
    %v601 = vlaneseq
    %v602 = vshrl.u32 %v601, 7
    %v603 = vsub.s32 0, %v602
    %v604 = vrot.slane %v599, %v603
    %v606 = vadd.f32 %v596, %v604
    %v607 = vmax.f32 %v606, 0.0
    %v608 = vld [vmem:[#allocation20] sm:$0xff]
    %v609 = vld [vmem:[#allocation20 + $0x8] sm:$0xff]
    %v610 = vld [vmem:[#allocation20 + $0x10] sm:$0xff]
    %v611 = vld [vmem:[#allocation20 + $0x18] sm:$0xff]
    %v612 = vld [vmem:[#allocation20 + $0x20] sm:$0xff]
    %v613 = vld [vmem:[#allocation20 + $0x28] sm:$0xff]
    %v614 = vld [vmem:[#allocation20 + $0x30] sm:$0xff]
    %v615 = vld [vmem:[#allocation20 + $0x38] sm:$0xff]
    %v616 = vld [vmem:[#allocation22] sm:$0x1]
    %v618 = vlaneseq
    %v619 = vshrl.u32 %v618, 7
    %v620 = vsub.s32 0, %v619
    %v621 = vrot.slane %v616, %v620
    %vm623 = vcmask 523264
    %v625 = vsel %vm623, %v607, 0
    %627 = vmatprep.subr.mxu0 0.0
    %628 = vmatpush1.msra.mxu0 0.0
    %629 = vmatprep.subr.mxu0 0.0
    %630 = vmatpush1.msra.mxu0 0.0
    %631 = vmatprep.subr.mxu0 0.0
    %632 = vmatpush1.msra.mxu0 0.0
    %633 = vmatprep.subr.mxu0 0.0
    %634 = vmatpush1.msra.mxu0 0.0
    %635 = vmatprep.subr.mxu0 0.0
    %636 = vmatpush1.msra.mxu0 0.0
    %637 = vmatprep.subr.mxu0 0.0
    %638 = vmatpush1.msra.mxu0 0.0
    %639 = vmatprep.subr.mxu0 0.0
    %640 = vmatpush1.msra.mxu0 0.0
    %641 = vmatprep.subr.mxu0 0.0
    %642 = vmatpush1.msra.mxu0 0.0
    %643 = vmatprep.subr.mxu0 0.0
    %644 = vmatpush1.msra.mxu0 %v615
    %645 = vmatprep.subr.mxu0 0.0
    %646 = vmatpush1.msra.mxu0 %v614
    %647 = vmatprep.subr.mxu0 0.0
    %648 = vmatpush1.msra.mxu0 %v613
    %649 = vmatprep.subr.mxu0 0.0
    %650 = vmatpush1.msra.mxu0 %v612
    %651 = vmatprep.subr.mxu0 0.0
    %652 = vmatpush1.msra.mxu0 %v611
    %653 = vmatprep.subr.mxu0 0.0
    %654 = vmatpush1.msra.mxu0 %v610
    %655 = vmatprep.subr.mxu0 0.0
    %656 = vmatpush1.msra.mxu0 %v609
    %657 = vmatprep.subr.mxu0 0.0
    %658 = vmatpush1.msra.mxu0 %v608
    %659 = vmatprep.subr.mxu0 0.0
    %660 = vmatpush2.msra.mxu0 0.0
    %661 = vmatprep.subr.mxu0 0.0
    %662 = vmatpush2.msra.mxu0 0.0
    %663 = vmatprep.subr.mxu0 0.0
    %664 = vmatpush2.msra.mxu0 0.0
    %665 = vmatprep.subr.mxu0 0.0
    %666 = vmatpush2.msra.mxu0 0.0
    %667 = vmatprep.subr.mxu0 0.0
    %668 = vmatpush2.msra.mxu0 0.0
    %669 = vmatprep.subr.mxu0 0.0
    %670 = vmatpush2.msra.mxu0 0.0
    %671 = vmatprep.subr.mxu0 0.0
    %672 = vmatpush2.msra.mxu0 0.0
    %673 = vmatprep.subr.mxu0 0.0
    %674 = vmatpush2.msra.mxu0 0.0
    %675 = vmatprep.subr.mxu0 0.0
    %676 = vmatpush2.msra.mxu0 0.0
    %677 = vmatprep.subr.mxu0 0.0
    %678 = vmatpush2.msra.mxu0 0.0
    %679 = vmatprep.subr.mxu0 0.0
    %680 = vmatpush2.msra.mxu0 0.0
    %681 = vmatprep.subr.mxu0 0.0
    %682 = vmatpush2.msra.mxu0 0.0
    %683 = vmatprep.subr.mxu0 0.0
    %684 = vmatpush2.msra.mxu0 0.0
    %685 = vmatprep.subr.mxu0 0.0
    %686 = vmatpush2.msra.mxu0 0.0
    %687 = vmatprep.subr.mxu0 0.0
    %688 = vmatpush2.msra.mxu0 0.0
    %689 = vmatprep.subr.mxu0 0.0
    %690 = vmatpush2.msra.mxu0 0.0
    %691 = vmatprep.mubr.f32.mxu0 0.0
    %692 = vmatmul.mubr.f32.gmra.mxu0 %v625
    %v693 = vpop.f32.mrf.mxu0
    %v694 = vadd.f32 %v621, %v693
    %v695 = vpop.f32.mrf.mxu0
    %696 = vdwg.mxu0
    %v697 = vmax.f32 %v694, 0.0
    %v698 = vld [vmem:[#allocation23] sm:$0xff]
    %v699 = vld [vmem:[#allocation23 + $0x8] sm:$0xff]
    %v700 = vld [vmem:[#allocation23 + $0x10] sm:$0xff]
    %v701 = vld [vmem:[#allocation23 + $0x18] sm:$0xff]
    %v702 = vld [vmem:[#allocation25] sm:$0x1]
    %v704 = vlaneseq
    %v705 = vshrl.u32 %v704, 7
    %v706 = vsub.s32 0, %v705
    %v707 = vrot.slane %v702, %v706
    %v710 = vsel %vm412, %v697, 0
    %712 = vmatprep.subr.mxu0 0.0
    %713 = vmatpush1.msra.mxu0 0.0
    %714 = vmatprep.subr.mxu0 0.0
    %715 = vmatpush1.msra.mxu0 0.0
    %716 = vmatprep.subr.mxu0 0.0
    %717 = vmatpush1.msra.mxu0 0.0
    %718 = vmatprep.subr.mxu0 0.0
    %719 = vmatpush1.msra.mxu0 0.0
    %720 = vmatprep.subr.mxu0 0.0
    %721 = vmatpush1.msra.mxu0 0.0
    %722 = vmatprep.subr.mxu0 0.0
    %723 = vmatpush1.msra.mxu0 0.0
    %724 = vmatprep.subr.mxu0 0.0
    %725 = vmatpush1.msra.mxu0 0.0
    %726 = vmatprep.subr.mxu0 0.0
    %727 = vmatpush1.msra.mxu0 0.0
    %728 = vmatprep.subr.mxu0 0.0
    %729 = vmatpush1.msra.mxu0 0.0
    %730 = vmatprep.subr.mxu0 0.0
    %731 = vmatpush1.msra.mxu0 0.0
    %732 = vmatprep.subr.mxu0 0.0
    %733 = vmatpush1.msra.mxu0 0.0
    %734 = vmatprep.subr.mxu0 0.0
    %735 = vmatpush1.msra.mxu0 0.0
    %736 = vmatprep.subr.mxu0 0.0
    %737 = vmatpush1.msra.mxu0 %v701
    %738 = vmatprep.subr.mxu0 0.0
    %739 = vmatpush1.msra.mxu0 %v700
    %740 = vmatprep.subr.mxu0 0.0
    %741 = vmatpush1.msra.mxu0 %v699
    %742 = vmatprep.subr.mxu0 0.0
    %743 = vmatpush1.msra.mxu0 %v698
    %744 = vmatprep.subr.mxu0 0.0
    %745 = vmatpush2.msra.mxu0 0.0
    %746 = vmatprep.subr.mxu0 0.0
    %747 = vmatpush2.msra.mxu0 0.0
    %748 = vmatprep.subr.mxu0 0.0
    %749 = vmatpush2.msra.mxu0 0.0
    %750 = vmatprep.subr.mxu0 0.0
    %751 = vmatpush2.msra.mxu0 0.0
    %752 = vmatprep.subr.mxu0 0.0
    %753 = vmatpush2.msra.mxu0 0.0
    %754 = vmatprep.subr.mxu0 0.0
    %755 = vmatpush2.msra.mxu0 0.0
    %756 = vmatprep.subr.mxu0 0.0
    %757 = vmatpush2.msra.mxu0 0.0
    %758 = vmatprep.subr.mxu0 0.0
    %759 = vmatpush2.msra.mxu0 0.0
    %760 = vmatprep.subr.mxu0 0.0
    %761 = vmatpush2.msra.mxu0 0.0
    %762 = vmatprep.subr.mxu0 0.0
    %763 = vmatpush2.msra.mxu0 0.0
    %764 = vmatprep.subr.mxu0 0.0
    %765 = vmatpush2.msra.mxu0 0.0
    %766 = vmatprep.subr.mxu0 0.0
    %767 = vmatpush2.msra.mxu0 0.0
    %768 = vmatprep.subr.mxu0 0.0
    %769 = vmatpush2.msra.mxu0 0.0
    %770 = vmatprep.subr.mxu0 0.0
    %771 = vmatpush2.msra.mxu0 0.0
    %772 = vmatprep.subr.mxu0 0.0
    %773 = vmatpush2.msra.mxu0 0.0
    %774 = vmatprep.subr.mxu0 0.0
    %775 = vmatpush2.msra.mxu0 0.0
    %776 = vmatprep.mubr.f32.mxu0 0.0
    %777 = vmatmul.mubr.f32.gmra.mxu0 %v710
    %v778 = vpop.f32.mrf.mxu0
    %v779 = vadd.f32 %v707, %v778
    %v780 = vpop.f32.mrf.mxu0
    %781 = vdwg.mxu0
    %v782 = vld [vmem:[%s19] sm:$0xff]
    %v783 = vld [vmem:[%s19 + $0x8] sm:$0xff]
    %v784 = vld [vmem:[%s19 + $0x10] sm:$0xff]
    %v785 = vld [vmem:[%s19 + $0x18] sm:$0xff]
    %v786 = vld [vmem:[%s20] sm:$0x1]
    %v788 = vlaneseq
    %v789 = vshrl.u32 %v788, 7
    %v790 = vsub.s32 0, %v789
    %v791 = vrot.slane %v786, %v790
    %793 = vrot.lane.b32.xlu0 %v697, 96
    %v794 = vpop.permute.xlu0 %793
    %v795 = vsel %vm412, %v794, 0
    %797 = vmatprep.subr.mxu0 0.0
    %798 = vmatpush1.msra.mxu0 0.0
    %799 = vmatprep.subr.mxu0 0.0
    %800 = vmatpush1.msra.mxu0 0.0
    %801 = vmatprep.subr.mxu0 0.0
    %802 = vmatpush1.msra.mxu0 0.0
    %803 = vmatprep.subr.mxu0 0.0
    %804 = vmatpush1.msra.mxu0 0.0
    %805 = vmatprep.subr.mxu0 0.0
    %806 = vmatpush1.msra.mxu0 0.0
    %807 = vmatprep.subr.mxu0 0.0
    %808 = vmatpush1.msra.mxu0 0.0
    %809 = vmatprep.subr.mxu0 0.0
    %810 = vmatpush1.msra.mxu0 0.0
    %811 = vmatprep.subr.mxu0 0.0
    %812 = vmatpush1.msra.mxu0 0.0
    %813 = vmatprep.subr.mxu0 0.0
    %814 = vmatpush1.msra.mxu0 0.0
    %815 = vmatprep.subr.mxu0 0.0
    %816 = vmatpush1.msra.mxu0 0.0
    %817 = vmatprep.subr.mxu0 0.0
    %818 = vmatpush1.msra.mxu0 0.0
    %819 = vmatprep.subr.mxu0 0.0
    %820 = vmatpush1.msra.mxu0 0.0
    %821 = vmatprep.subr.mxu0 0.0
    %822 = vmatpush1.msra.mxu0 %v785
    %823 = vmatprep.subr.mxu0 0.0
    %824 = vmatpush1.msra.mxu0 %v784
    %825 = vmatprep.subr.mxu0 0.0
    %826 = vmatpush1.msra.mxu0 %v783
    %827 = vmatprep.subr.mxu0 0.0
    %828 = vmatpush1.msra.mxu0 %v782
    %829 = vmatprep.subr.mxu0 0.0
    %830 = vmatpush2.msra.mxu0 0.0
    %831 = vmatprep.subr.mxu0 0.0
    %832 = vmatpush2.msra.mxu0 0.0
    %833 = vmatprep.subr.mxu0 0.0
    %834 = vmatpush2.msra.mxu0 0.0
    %835 = vmatprep.subr.mxu0 0.0
    %836 = vmatpush2.msra.mxu0 0.0
    %837 = vmatprep.subr.mxu0 0.0
    %838 = vmatpush2.msra.mxu0 0.0
    %839 = vmatprep.subr.mxu0 0.0
    %840 = vmatpush2.msra.mxu0 0.0
    %841 = vmatprep.subr.mxu0 0.0
    %842 = vmatpush2.msra.mxu0 0.0
    %843 = vmatprep.subr.mxu0 0.0
    %844 = vmatpush2.msra.mxu0 0.0
    %845 = vmatprep.subr.mxu0 0.0
    %846 = vmatpush2.msra.mxu0 0.0
    %847 = vmatprep.subr.mxu0 0.0
    %848 = vmatpush2.msra.mxu0 0.0
    %849 = vmatprep.subr.mxu0 0.0
    %850 = vmatpush2.msra.mxu0 0.0
    %851 = vmatprep.subr.mxu0 0.0
    %852 = vmatpush2.msra.mxu0 0.0
    %853 = vmatprep.subr.mxu0 0.0
    %854 = vmatpush2.msra.mxu0 0.0
    %855 = vmatprep.subr.mxu0 0.0
    %856 = vmatpush2.msra.mxu0 0.0
    %857 = vmatprep.subr.mxu0 0.0
    %858 = vmatpush2.msra.mxu0 0.0
    %859 = vmatprep.subr.mxu0 0.0
    %860 = vmatpush2.msra.mxu0 0.0
    %861 = vmatprep.mubr.f32.mxu0 0.0
    %862 = vmatmul.mubr.f32.gmra.mxu0 %v795
    %v863 = vpop.f32.mrf.mxu0
    %v864 = vadd.f32 %v791, %v863
    %v865 = vpop.f32.mrf.mxu0
    %866 = vdwg.mxu0
    %v867 = vxor.u32 %v864, 2147483648
    %v868 = vmul.f32 %v867, 1.442695
    %v869 = vpow.pop %v868
    %v870 = vadd.f32 %v869, 1.0
    %v871 = vrcp.pop %v870
    %v872 = vmul.f32 1.0, %v871
    %874 = vrot.lane.b32.xlu0 %v393, 32
    %v875 = vpop.permute.xlu0 %874
    %878 = vrot.lane.b32.xlu0 %v399, 32
    %v879 = vpop.permute.xlu0 %878
    %882 = vrot.lane.b32.xlu0 %v779, 64
    %v883 = vpop.permute.xlu0 %882
    %886 = vrot.lane.b32.xlu0 %v872, 96
    %v887 = vpop.permute.xlu0 %886
    %v889 = vsel %vm525, %v508, %v514
    %v890 = vsel %vm412, %v889, %v875
    %vm891 = vcmask 392192
    %v892 = vsel %vm891, %v890, %v879
    %v893 = vsel %vm623, %v892, %v883
    %vm894 = vcmask 785408
    %v895 = vsel %vm894, %v893, %v887
    %v896 = vsel %vm412, %v887, 0.0
    %v899 = vcombine.low %v895, %v896
    %v901 = vunpack.c.l.s4 1983009808
    %v902 = vunpack.c.0.s8 %v901
    %v903 = vlaneseq
    %v904 = vshrl.u32 %v903, 7
    %v905 = vsub.s32 %v902, %v904
    %v906 = vrot.slane %v899, %v905
    %908 = vst [vmem:[#allocation26] sm:$0xf] %v906
    // Predicated region
    $region146: #{tpu_custom_call.1} parent=1 // pred_check
      _
    $region147: #{tpu_custom_call.1} parent=1 // pred_check_branch
      %910 = sbr.rel (0) target = $region149
    $region148: #{tpu_custom_call.1} parent=1 // pred_region
      %s912 = ssub.s32 64, 64
      %913 = vsyncadd [#allocation4], %s912
      %s915 = sshll.u32 [#allocation26], 4
      %s916 = int_to_ptr.vmem [resolvable:$true] %s915
      %918 = dma.vmem_to_hbm [thread:$0]  %s916, 64, %s21, [#allocation4]
    $region149: #{tpu_custom_call.1} parent=1 // pred_fallthru
      _
    // Predicated region
    $region150: #{tpu_custom_call.1} parent=1 // pred_check
      _
    $region151: #{tpu_custom_call.1} parent=1 // pred_check_branch
      %920 = sbr.rel (0) target = $region153
    $region152: #{tpu_custom_call.1} parent=1 // pred_region
      %921 = dma.done [#allocation4], 64
    $region153: #{tpu_custom_call.1} parent=1 // pred_fallthru
      _
    %922 = vsyncpa [#allocation3], 1
    %923 = vsyncpa [#allocation6], 1
    %924 = vsyncpa [#allocation9], 1
    %925 = vsyncpa [#allocation12], 1
    %926 = vsyncpa [#allocation15], 1
    %927 = vsyncpa [#allocation18], 1
    %928 = vsyncpa [#allocation21], 1
    %929 = vsyncpa [#allocation24], 1
    %930 = vsyncpa [#allocation4], 1

</llo_original>
